<compile_context>
chip_gen: v7x
topology: tpu7x:2x2x1
jax: 0.10.0
libtpu: 0.0.40
codegen_flags: <defaults>
</compile_context>

<pallas_src>
import jax
import jax.numpy as jnp
from jax import lax
from jax.experimental import pallas as pl
from jax.experimental.pallas import tpu as pltpu

_NEG_INF = -1e30          # Python float literal (no captured-const issues)
_LEAKY_SLOPE = 0.2        # PyG GATConv default negative_slope
_OUT_LANES = 128          # pad output classes to a full lane width


def _leaky_relu(x):
    return jnp.where(x >= 0, x, _LEAKY_SLOPE * x)


def _elu(x):
    # expm1(x) == tanh(x/2) * (exp(x) + 1) exactly; well conditioned near 0.
    return jnp.where(x > 0, x, jnp.tanh(0.5 * x) * (jnp.exp(x) + 1.0))


def _gat_net_kernel(x_ref, w1_ref, adst1_ref, asrc1_ref, r1t_ref, e1_ref,
                    g1_ref, r1_ref, bm1_ref, b1_ref, mask1_ref, mask2_ref,
                    w2_ref, adst2_ref, asrc2_ref, b2_ref, clsmask_ref,
                    out_ref):
    n = x_ref.shape[0]
    ones_row = jnp.ones((1, n), jnp.float32)

    # ---------------- layer 1: GATConv(F_in -> C1, heads=H1, concat=True) ----------
    # One lane-dense MXU matmul projects all heads at once (PyG concat order).
    xh1 = jnp.dot(x_ref[...], w1_ref[...], preferred_element_type=jnp.float32)      # [N, H*C1]

    # Head-batched attention scores, entirely on the MXU:
    #   dst_part[i, h*N + j] = att_dst[h] . xh1[i, head h]
    #   src_row [0, h*N + j] = att_src[h] . xh1[j, head h]
    dst_part = jnp.dot(xh1, adst1_ref[...], preferred_element_type=jnp.float32)     # [N, H*N]
    src_sel = jnp.dot(xh1, asrc1_ref[...], preferred_element_type=jnp.float32)      # [N, H*N]
    src_row = jnp.dot(ones_row, src_sel * r1t_ref[...],
                      preferred_element_type=jnp.float32)                           # [1, H*N]

    logits = _leaky_relu(dst_part + src_row) + mask1_ref[...]                       # [N, H*N]
    # Shared per-row max across heads (cancels per head in the softmax ratio).
    m = jnp.max(logits, axis=-1, keepdims=True)
    e = jnp.exp(logits - m)                                                         # masked -> exactly 0
    denom = jnp.dot(e, g1_ref[...], preferred_element_type=jnp.float32)             # [N, H]
    denom = jnp.maximum(denom, 1e-30)                                               # fully-underflowed head -> 0, not NaN
    inv = pl.reciprocal(denom, approx=True)                                         # EUP
    alpha = e * jnp.dot(inv, e1_ref[...], preferred_element_type=jnp.float32)       # [N, H*N]

    # Aggregation for all heads in ONE block-diagonal matmul (no concat relayout).
    xh1_bd = bm1_ref[...] * jnp.dot(r1_ref[...], xh1,
                                    preferred_element_type=jnp.float32)             # [H*N, H*C1]
    h1 = jnp.dot(alpha, xh1_bd, preferred_element_type=jnp.float32) + b1_ref[...]   # [N, H*C1]
    h1 = _elu(h1)                                                                   # F.elu

    # ---------------- layer 2: GATConv(H1*C1 -> num_classes, heads=1) --------------
    # Class dim padded to 128 lanes (w2/bias zero-padded) so every store is lane-dense.
    xh2 = jnp.dot(h1, w2_ref[...], preferred_element_type=jnp.float32)              # [N, 128]
    s_dst2 = jnp.dot(xh2, adst2_ref[...], preferred_element_type=jnp.float32)       # [N, 1]
    s_src2 = jnp.dot(xh2, asrc2_ref[...], preferred_element_type=jnp.float32)       # [N, 1]
    # Turn the tiny [N,1] src column into a [1,N] row without an XLU reshape:
    rr = lax.broadcasted_iota(jnp.int32, (n, n), 0)
    cc = lax.broadcasted_iota(jnp.int32, (n, n), 1)
    eye_n = (rr == cc).astype(jnp.float32)
    s_src2_row = jnp.dot(ones_row, s_src2 * eye_n,
                         preferred_element_type=jnp.float32)                        # [1, N]

    logits2 = _leaky_relu(s_dst2 + s_src2_row) + mask2_ref[...]                     # [N, N]
    m2 = jnp.max(logits2, axis=-1, keepdims=True)
    e2 = jnp.exp(logits2 - m2)
    denom2 = jnp.maximum(jnp.sum(e2, axis=-1, keepdims=True), 1e-30)
    alpha2 = e2 * pl.reciprocal(denom2, approx=True)

    h2 = jnp.dot(alpha2, xh2, preferred_element_type=jnp.float32) + b2_ref[...]     # [N, 128]
    h2 = h2 + clsmask_ref[...]                       # -1e30 on pad lanes, 0 on real classes

    # F.log_softmax(x, dim=1): pad lanes underflow to exp(...) == 0, so the row lse
    # equals the lse over the real classes.
    mm = jnp.max(h2, axis=-1, keepdims=True)
    lse = mm + jnp.log(jnp.sum(jnp.exp(h2 - mm), axis=-1, keepdims=True))
    out_ref[...] = h2 - lse                          # lane-dense [N, 128] store


def _block_diag(a):
    """[H, C] -> [H*C, H]; column h holds head h's attention vector (zeros elsewhere)."""
    heads, ch = a.shape
    eye = jnp.eye(heads, dtype=a.dtype)
    return (a[:, :, None] * eye[:, None, :]).reshape(heads * ch, heads)


@jax.jit
def gat_net_forward(x, adj, params1, params2):
    """GAT_Net forward (eval mode: F.dropout and attention dropout are identity).

    params*: (w [H, F_in, C], att_src [H, C], att_dst [H, C], bias [H*C]) in the
    natural GATConv layout; repacked lane-dense here (cheap XLA ops, done once).
    """
    w1, a_src1, a_dst1, b1 = params1
    w2, a_src2, a_dst2, b2 = params2
    heads1, f_in, c1 = w1.shape
    hc1 = heads1 * c1
    n_cls = w2.shape[2]
    n = x.shape[0]
    f32 = jnp.float32
    assert n_cls <= _OUT_LANES

    # Lane-dense weight repack: x @ w1f yields all heads' projections concatenated
    # along lanes (PyG concat order).
    w1f = jnp.transpose(w1, (1, 0, 2)).reshape(f_in, hc1).astype(f32)       # [F_in, H*C1]
    w2f = jnp.transpose(w2, (1, 0, 2)).reshape(hc1, n_cls).astype(f32)      # [H*C1, n_cls]
    w2p = jnp.zeros((hc1, _OUT_LANES), f32).at[:, :n_cls].set(w2f)          # pad to 128 lanes

    # Head-batching constants (tiny, computed once outside the kernel).
    eye_h = jnp.eye(heads1, dtype=f32)
    e1 = jnp.kron(eye_h, jnp.ones((1, n), f32))                             # [H, H*N]
    g1 = jnp.kron(eye_h, jnp.ones((n, 1), f32))                             # [H*N, H]
    r1 = jnp.kron(jnp.ones((heads1, 1), f32), jnp.eye(n, dtype=f32))        # [H*N, N]
    r1t = jnp.tile(jnp.eye(n, dtype=f32), (1, heads1))                      # [N, H*N]
    bm1 = jnp.kron(eye_h, jnp.ones((n, c1), f32))                           # [H*N, H*C1]
    adst1_wide = _block_diag(a_dst1.astype(f32)) @ e1                       # [H*C1, H*N]
    asrc1_wide = _block_diag(a_src1.astype(f32)) @ e1                       # [H*C1, H*N]

    # Dense additive edge mask (0 on edge j->i incl. self-loop, -1e30 otherwise),
    # pre-tiled per head for layer 1.
    neg_mask = jnp.where(adj > 0.0, 0.0, _NEG_INF).astype(f32)              # [N, N]
    mask1 = jnp.tile(neg_mask, (1, heads1))                                 # [N, H*N]

    # Layer-2 (single head) attention vectors / bias, zero-padded to 128 lanes.
    adst2p = jnp.zeros((_OUT_LANES, 1), f32).at[:n_cls, 0].set(a_dst2[0].astype(f32))
    asrc2p = jnp.zeros((_OUT_LANES, 1), f32).at[:n_cls, 0].set(a_src2[0].astype(f32))
    b2p = jnp.zeros((1, _OUT_LANES), f32).at[0, :n_cls].set(b2.astype(f32))
    cls_mask = jnp.where(jnp.arange(_OUT_LANES) < n_cls, 0.0, _NEG_INF).astype(f32)
    cls_mask = cls_mask.reshape(1, _OUT_LANES)

    out_pad = pl.pallas_call(
        _gat_net_kernel,
        out_shape=jax.ShapeDtypeStruct((n, _OUT_LANES), f32),
        compiler_params=pltpu.CompilerParams(vmem_limit_bytes=32 * 1024 * 1024),
    )(x.astype(f32), w1f, adst1_wide, asrc1_wide, r1t, e1, g1, r1, bm1,
      b1.reshape(1, hc1).astype(f32), mask1, neg_mask,
      w2p, adst2p, asrc2p, b2p, cls_mask)

    return out_pad[:, :n_cls]


if __name__ == "__main__":
    key = jax.random.PRNGKey(0)
    N, F_in = 16, 8                 # data.num_features = 8, 16 nodes
    layer_size = [4, 16]            # module requires layer_size[1] == layer_size[0] ** 2
    H1 = C1 = layer_size[0]
    num_classes = 3                 # == int(data.y.max() + 1) with y in {0, 1, 2}

    keys = jax.random.split(key, 10)
    x = jax.random.normal(keys[0], (N, F_in), jnp.float32)
    _y = jax.random.randint(keys[1], (N,), 0, num_classes)   # synthetic labels (define num_classes)

    # deterministic small graph: bidirectional ring + a few chords
    src = list(range(N)) + [(i + 1) % N for i in range(N)] + [0, N // 2, 3]
    dst = [(i + 1) % N for i in range(N)] + list(range(N)) + [N // 2, 0, 9]
    adj = jnp.zeros((N, N), jnp.float32).at[jnp.array(dst), jnp.array(src)].set(1.0)
    adj = jnp.maximum(adj, jnp.eye(N, dtype=jnp.float32))     # add_self_loops=True

    # att1 = GATConv(F_in, C1, heads=H1): W, att_src, att_dst, bias
    w1 = 0.3 * jax.random.normal(keys[2], (H1, F_in, C1), jnp.float32)
    a_src1 = 0.3 * jax.random.normal(keys[3], (H1, C1), jnp.float32)
    a_dst1 = 0.3 * jax.random.normal(keys[4], (H1, C1), jnp.float32)
    b1 = 0.1 * jax.random.normal(keys[5], (H1 * C1,), jnp.float32)

    # att2 = GATConv(H1*C1, num_classes, heads=1)
    w2 = 0.3 * jax.random.normal(keys[6], (1, H1 * C1, num_classes), jnp.float32)
    a_src2 = 0.3 * jax.random.normal(keys[7], (1, num_classes), jnp.float32)
    a_dst2 = 0.3 * jax.random.normal(keys[8], (1, num_classes), jnp.float32)
    b2 = 0.1 * jax.random.normal(keys[9], (num_classes,), jnp.float32)

    out = gat_net_forward(x, adj, (w1, a_src1, a_dst1, b1), (w2, a_src2, a_dst2, b2))
    out = jax.block_until_ready(out)
    assert out.shape == (N, num_classes)
    # log_softmax rows must exponentiate-sum to 1
    assert bool(jnp.all(jnp.abs(jnp.sum(jnp.exp(out), axis=1) - 1.0) < 1e-4))
    print("KERNEL_OK")
</pallas_src>

<mosaic_0001>
module attributes {stable_mosaic.version = 11 : i64} {
  func.func @_gat_net_kernel(%arg0: memref<16x8xf32, #tpu.memory_space<vmem>>, %arg1: memref<8x16xf32, #tpu.memory_space<vmem>>, %arg2: memref<16x64xf32, #tpu.memory_space<vmem>>, %arg3: memref<16x64xf32, #tpu.memory_space<vmem>>, %arg4: memref<16x64xf32, #tpu.memory_space<vmem>>, %arg5: memref<4x64xf32, #tpu.memory_space<vmem>>, %arg6: memref<64x4xf32, #tpu.memory_space<vmem>>, %arg7: memref<64x16xf32, #tpu.memory_space<vmem>>, %arg8: memref<64x16xf32, #tpu.memory_space<vmem>>, %arg9: memref<1x16xf32, #tpu.memory_space<vmem>>, %arg10: memref<16x64xf32, #tpu.memory_space<vmem>>, %arg11: memref<16x16xf32, #tpu.memory_space<vmem>>, %arg12: memref<16x128xf32, #tpu.memory_space<vmem>>, %arg13: memref<128x1xf32, #tpu.memory_space<vmem>>, %arg14: memref<128x1xf32, #tpu.memory_space<vmem>>, %arg15: memref<1x128xf32, #tpu.memory_space<vmem>>, %arg16: memref<1x128xf32, #tpu.memory_space<vmem>>, %arg17: memref<16x128xf32, #tpu.memory_space<vmem>>) attributes {dimension_semantics = [], scalar_prefetch = 0 : i64, scratch_operands = 0 : i64, tpu.core_type = #tpu.core_type<tc>} {
    %cst = arith.constant 1.000000e+00 : f32
    %0 = vector.broadcast %cst : f32 to vector<1x16xf32>
    %c0 = arith.constant 0 : index
    %c0_0 = arith.constant 0 : index
    %1 = vector.load %arg0[%c0, %c0_0] : memref<16x8xf32, #tpu.memory_space<vmem>>, vector<16x8xf32>
    %c0_1 = arith.constant 0 : index
    %c0_2 = arith.constant 0 : index
    %2 = vector.load %arg1[%c0_1, %c0_2] : memref<8x16xf32, #tpu.memory_space<vmem>>, vector<8x16xf32>
    %cst_3 = arith.constant dense<0.000000e+00> : vector<16x16xf32>
    %3 = tpu.matmul %1, %2, %cst_3 {dimension_numbers = #tpu.dot_dimension_numbers<[1], [0], [0], [1], [0, 0, 1, 1], [], []>} : vector<16x8xf32>, vector<8x16xf32>, vector<16x16xf32> -> vector<16x16xf32>
    %c0_4 = arith.constant 0 : index
    %c0_5 = arith.constant 0 : index
    %4 = vector.load %arg2[%c0_4, %c0_5] : memref<16x64xf32, #tpu.memory_space<vmem>>, vector<16x64xf32>
    %cst_6 = arith.constant dense<0.000000e+00> : vector<16x64xf32>
    %5 = tpu.matmul %3, %4, %cst_6 {dimension_numbers = #tpu.dot_dimension_numbers<[1], [0], [0], [1], [0, 0, 1, 1], [], []>} : vector<16x16xf32>, vector<16x64xf32>, vector<16x64xf32> -> vector<16x64xf32>
    %c0_7 = arith.constant 0 : index
    %c0_8 = arith.constant 0 : index
    %6 = vector.load %arg3[%c0_7, %c0_8] : memref<16x64xf32, #tpu.memory_space<vmem>>, vector<16x64xf32>
    %cst_9 = arith.constant dense<0.000000e+00> : vector<16x64xf32>
    %7 = tpu.matmul %3, %6, %cst_9 {dimension_numbers = #tpu.dot_dimension_numbers<[1], [0], [0], [1], [0, 0, 1, 1], [], []>} : vector<16x16xf32>, vector<16x64xf32>, vector<16x64xf32> -> vector<16x64xf32>
    %c0_10 = arith.constant 0 : index
    %c0_11 = arith.constant 0 : index
    %8 = vector.load %arg4[%c0_10, %c0_11] : memref<16x64xf32, #tpu.memory_space<vmem>>, vector<16x64xf32>
    %9 = arith.mulf %7, %8 : vector<16x64xf32>
    %cst_12 = arith.constant dense<0.000000e+00> : vector<1x64xf32>
    %10 = tpu.matmul %0, %9, %cst_12 {dimension_numbers = #tpu.dot_dimension_numbers<[1], [0], [0], [1], [0, 0, 1, 1], [], []>} : vector<1x16xf32>, vector<16x64xf32>, vector<1x64xf32> -> vector<1x64xf32>
    %11 = vector.broadcast %10 : vector<1x64xf32> to vector<16x64xf32>
    %12 = arith.addf %5, %11 : vector<16x64xf32>
    %cst_13 = arith.constant 0.000000e+00 : f32
    %13 = vector.broadcast %cst_13 : f32 to vector<16x64xf32>
    %14 = arith.cmpf oge, %12, %13 : vector<16x64xf32>
    %cst_14 = arith.constant 2.000000e-01 : f32
    %15 = vector.broadcast %cst_14 : f32 to vector<16x64xf32>
    %16 = arith.mulf %15, %12 : vector<16x64xf32>
    %17 = arith.select %14, %12, %16 : vector<16x64xi1>, vector<16x64xf32>
    %c0_15 = arith.constant 0 : index
    %c0_16 = arith.constant 0 : index
    %18 = vector.load %arg10[%c0_15, %c0_16] : memref<16x64xf32, #tpu.memory_space<vmem>>, vector<16x64xf32>
    %19 = arith.addf %17, %18 : vector<16x64xf32>
    %cst_17 = arith.constant dense<0xFF800000> : vector<16xf32>
    %20 = vector.multi_reduction <maximumf>, %19, %cst_17 [1] : vector<16x64xf32> to vector<16xf32>
    %21 = vector.shape_cast %20 : vector<16xf32> to vector<16x1xf32>
    %22 = vector.broadcast %21 : vector<16x1xf32> to vector<16x64xf32>
    %23 = arith.subf %19, %22 : vector<16x64xf32>
    %24 = math.exp %23 : vector<16x64xf32>
    %c0_18 = arith.constant 0 : index
    %c0_19 = arith.constant 0 : index
    %25 = vector.load %arg6[%c0_18, %c0_19] : memref<64x4xf32, #tpu.memory_space<vmem>>, vector<64x4xf32>
    %cst_20 = arith.constant dense<0.000000e+00> : vector<16x4xf32>
    %26 = tpu.matmul %24, %25, %cst_20 {dimension_numbers = #tpu.dot_dimension_numbers<[1], [0], [0], [1], [0, 0, 1, 1], [], []>} : vector<16x64xf32>, vector<64x4xf32>, vector<16x4xf32> -> vector<16x4xf32>
    %cst_21 = arith.constant 1.000000e-30 : f32
    %27 = vector.broadcast %cst_21 : f32 to vector<16x4xf32>
    %28 = arith.maximumf %26, %27 : vector<16x4xf32>
    %29 = tpu.reciprocal %28 {approx = true} : vector<16x4xf32> -> vector<16x4xf32>
    %c0_22 = arith.constant 0 : index
    %c0_23 = arith.constant 0 : index
    %30 = vector.load %arg5[%c0_22, %c0_23] : memref<4x64xf32, #tpu.memory_space<vmem>>, vector<4x64xf32>
    %cst_24 = arith.constant dense<0.000000e+00> : vector<16x64xf32>
    %31 = tpu.matmul %29, %30, %cst_24 {dimension_numbers = #tpu.dot_dimension_numbers<[1], [0], [0], [1], [0, 0, 1, 1], [], []>} : vector<16x4xf32>, vector<4x64xf32>, vector<16x64xf32> -> vector<16x64xf32>
    %32 = arith.mulf %24, %31 : vector<16x64xf32>
    %c0_25 = arith.constant 0 : index
    %c0_26 = arith.constant 0 : index
    %33 = vector.load %arg8[%c0_25, %c0_26] : memref<64x16xf32, #tpu.memory_space<vmem>>, vector<64x16xf32>
    %c0_27 = arith.constant 0 : index
    %c0_28 = arith.constant 0 : index
    %34 = vector.load %arg7[%c0_27, %c0_28] : memref<64x16xf32, #tpu.memory_space<vmem>>, vector<64x16xf32>
    %cst_29 = arith.constant dense<0.000000e+00> : vector<64x16xf32>
    %35 = tpu.matmul %34, %3, %cst_29 {dimension_numbers = #tpu.dot_dimension_numbers<[1], [0], [0], [1], [0, 0, 1, 1], [], []>} : vector<64x16xf32>, vector<16x16xf32>, vector<64x16xf32> -> vector<64x16xf32>
    %36 = arith.mulf %33, %35 : vector<64x16xf32>
    %cst_30 = arith.constant dense<0.000000e+00> : vector<16x16xf32>
    %37 = tpu.matmul %32, %36, %cst_30 {dimension_numbers = #tpu.dot_dimension_numbers<[1], [0], [0], [1], [0, 0, 1, 1], [], []>} : vector<16x64xf32>, vector<64x16xf32>, vector<16x16xf32> -> vector<16x16xf32>
    %c0_31 = arith.constant 0 : index
    %c0_32 = arith.constant 0 : index
    %38 = vector.load %arg9[%c0_31, %c0_32] : memref<1x16xf32, #tpu.memory_space<vmem>>, vector<1x16xf32>
    %39 = vector.broadcast %38 : vector<1x16xf32> to vector<16x16xf32>
    %40 = arith.addf %37, %39 : vector<16x16xf32>
    %cst_33 = arith.constant 0.000000e+00 : f32
    %41 = vector.broadcast %cst_33 : f32 to vector<16x16xf32>
    %42 = arith.cmpf ogt, %40, %41 : vector<16x16xf32>
    %cst_34 = arith.constant 5.000000e-01 : f32
    %43 = vector.broadcast %cst_34 : f32 to vector<16x16xf32>
    %44 = arith.mulf %43, %40 : vector<16x16xf32>
    %45 = math.tanh %44 : vector<16x16xf32>
    %46 = math.exp %40 : vector<16x16xf32>
    %cst_35 = arith.constant 1.000000e+00 : f32
    %47 = vector.broadcast %cst_35 : f32 to vector<16x16xf32>
    %48 = arith.addf %46, %47 : vector<16x16xf32>
    %49 = arith.mulf %45, %48 : vector<16x16xf32>
    %50 = arith.select %42, %40, %49 : vector<16x16xi1>, vector<16x16xf32>
    %c0_36 = arith.constant 0 : index
    %c0_37 = arith.constant 0 : index
    %51 = vector.load %arg12[%c0_36, %c0_37] : memref<16x128xf32, #tpu.memory_space<vmem>>, vector<16x128xf32>
    %cst_38 = arith.constant dense<0.000000e+00> : vector<16x128xf32>
    %52 = tpu.matmul %50, %51, %cst_38 {dimension_numbers = #tpu.dot_dimension_numbers<[1], [0], [0], [1], [0, 0, 1, 1], [], []>} : vector<16x16xf32>, vector<16x128xf32>, vector<16x128xf32> -> vector<16x128xf32>
    %c0_39 = arith.constant 0 : index
    %c0_40 = arith.constant 0 : index
    %53 = vector.load %arg13[%c0_39, %c0_40] : memref<128x1xf32, #tpu.memory_space<vmem>>, vector<128x1xf32>
    %cst_41 = arith.constant dense<0.000000e+00> : vector<16x1xf32>
    %54 = tpu.matmul %52, %53, %cst_41 {dimension_numbers = #tpu.dot_dimension_numbers<[1], [0], [0], [1], [0, 0, 1, 1], [], []>} : vector<16x128xf32>, vector<128x1xf32>, vector<16x1xf32> -> vector<16x1xf32>
    %c0_42 = arith.constant 0 : index
    %c0_43 = arith.constant 0 : index
    %55 = vector.load %arg14[%c0_42, %c0_43] : memref<128x1xf32, #tpu.memory_space<vmem>>, vector<128x1xf32>
    %cst_44 = arith.constant dense<0.000000e+00> : vector<16x1xf32>
    %56 = tpu.matmul %52, %55, %cst_44 {dimension_numbers = #tpu.dot_dimension_numbers<[1], [0], [0], [1], [0, 0, 1, 1], [], []>} : vector<16x128xf32>, vector<128x1xf32>, vector<16x1xf32> -> vector<16x1xf32>
    %57 = tpu.iota {dimensions = array<i32: 0>} : vector<16x16xi32>
    %58 = tpu.iota {dimensions = array<i32: 1>} : vector<16x16xi32>
    %59 = arith.cmpi eq, %57, %58 : vector<16x16xi32>
    %60 = arith.extui %59 : vector<16x16xi1> to vector<16x16xi32>
    %61 = arith.sitofp %60 : vector<16x16xi32> to vector<16x16xf32>
    %62 = vector.broadcast %56 : vector<16x1xf32> to vector<16x16xf32>
    %63 = arith.mulf %62, %61 : vector<16x16xf32>
    %cst_45 = arith.constant dense<0.000000e+00> : vector<1x16xf32>
    %64 = tpu.matmul %0, %63, %cst_45 {dimension_numbers = #tpu.dot_dimension_numbers<[1], [0], [0], [1], [0, 0, 1, 1], [], []>} : vector<1x16xf32>, vector<16x16xf32>, vector<1x16xf32> -> vector<1x16xf32>
    %65 = vector.broadcast %54 : vector<16x1xf32> to vector<16x16xf32>
    %66 = vector.broadcast %64 : vector<1x16xf32> to vector<16x16xf32>
    %67 = arith.addf %65, %66 : vector<16x16xf32>
    %cst_46 = arith.constant 0.000000e+00 : f32
    %68 = vector.broadcast %cst_46 : f32 to vector<16x16xf32>
    %69 = arith.cmpf oge, %67, %68 : vector<16x16xf32>
    %cst_47 = arith.constant 2.000000e-01 : f32
    %70 = vector.broadcast %cst_47 : f32 to vector<16x16xf32>
    %71 = arith.mulf %70, %67 : vector<16x16xf32>
    %72 = arith.select %69, %67, %71 : vector<16x16xi1>, vector<16x16xf32>
    %c0_48 = arith.constant 0 : index
    %c0_49 = arith.constant 0 : index
    %73 = vector.load %arg11[%c0_48, %c0_49] : memref<16x16xf32, #tpu.memory_space<vmem>>, vector<16x16xf32>
    %74 = arith.addf %72, %73 : vector<16x16xf32>
    %cst_50 = arith.constant dense<0xFF800000> : vector<16xf32>
    %75 = vector.multi_reduction <maximumf>, %74, %cst_50 [1] : vector<16x16xf32> to vector<16xf32>
    %76 = vector.shape_cast %75 : vector<16xf32> to vector<16x1xf32>
    %77 = vector.broadcast %76 : vector<16x1xf32> to vector<16x16xf32>
    %78 = arith.subf %74, %77 : vector<16x16xf32>
    %79 = math.exp %78 : vector<16x16xf32>
    %cst_51 = arith.constant dense<0.000000e+00> : vector<16xf32>
    %80 = vector.multi_reduction <add>, %79, %cst_51 [1] : vector<16x16xf32> to vector<16xf32>
    %81 = vector.shape_cast %80 : vector<16xf32> to vector<16x1xf32>
    %cst_52 = arith.constant 1.000000e-30 : f32
    %82 = vector.broadcast %cst_52 : f32 to vector<16x1xf32>
    %83 = arith.maximumf %81, %82 : vector<16x1xf32>
    %84 = tpu.reciprocal %83 {approx = true} : vector<16x1xf32> -> vector<16x1xf32>
    %85 = vector.broadcast %84 : vector<16x1xf32> to vector<16x16xf32>
    %86 = arith.mulf %79, %85 : vector<16x16xf32>
    %cst_53 = arith.constant dense<0.000000e+00> : vector<16x128xf32>
    %87 = tpu.matmul %86, %52, %cst_53 {dimension_numbers = #tpu.dot_dimension_numbers<[1], [0], [0], [1], [0, 0, 1, 1], [], []>} : vector<16x16xf32>, vector<16x128xf32>, vector<16x128xf32> -> vector<16x128xf32>
    %c0_54 = arith.constant 0 : index
    %c0_55 = arith.constant 0 : index
    %88 = vector.load %arg15[%c0_54, %c0_55] : memref<1x128xf32, #tpu.memory_space<vmem>>, vector<1x128xf32>
    %89 = vector.broadcast %88 : vector<1x128xf32> to vector<16x128xf32>
    %90 = arith.addf %87, %89 : vector<16x128xf32>
    %c0_56 = arith.constant 0 : index
    %c0_57 = arith.constant 0 : index
    %91 = vector.load %arg16[%c0_56, %c0_57] : memref<1x128xf32, #tpu.memory_space<vmem>>, vector<1x128xf32>
    %92 = vector.broadcast %91 : vector<1x128xf32> to vector<16x128xf32>
    %93 = arith.addf %90, %92 : vector<16x128xf32>
    %cst_58 = arith.constant dense<0xFF800000> : vector<16xf32>
    %94 = vector.multi_reduction <maximumf>, %93, %cst_58 [1] : vector<16x128xf32> to vector<16xf32>
    %95 = vector.shape_cast %94 : vector<16xf32> to vector<16x1xf32>
    %96 = vector.broadcast %95 : vector<16x1xf32> to vector<16x128xf32>
    %97 = arith.subf %93, %96 : vector<16x128xf32>
    %98 = math.exp %97 : vector<16x128xf32>
    %cst_59 = arith.constant dense<0.000000e+00> : vector<16xf32>
    %99 = vector.multi_reduction <add>, %98, %cst_59 [1] : vector<16x128xf32> to vector<16xf32>
    %100 = vector.shape_cast %99 : vector<16xf32> to vector<16x1xf32>
    %101 = math.log %100 : vector<16x1xf32>
    %102 = arith.addf %95, %101 : vector<16x1xf32>
    %103 = vector.broadcast %102 : vector<16x1xf32> to vector<16x128xf32>
    %104 = arith.subf %93, %103 : vector<16x128xf32>
    %c0_60 = arith.constant 0 : index
    %c0_61 = arith.constant 0 : index
    %105 = vector.load %arg17[%c0_60, %c0_61] : memref<16x128xf32, #tpu.memory_space<vmem>>, vector<16x128xf32>
    tpu.vector_store %arg17[%c0_60, %c0_61], %104 {strides = array<i32>} : memref<16x128xf32, #tpu.memory_space<vmem>>, vector<16x128xf32>,
    return
  }
}

</mosaic_0001>

<llo_original>
// kernel: tile.14
$region0: #{tile.14}
  %s0 = inlined_call_operand.vmem [shape: f32[16,4,16], index: 0, kind: input, shape index: {}]
  %s1 = inlined_call_operand.vmem [shape: f32[16,64], index: 1, kind: output, shape index: {}]
  $region1: #{tile.14} parent=0
    #allocation0 [shape = 'u8[65536]{0}', space=vmem, size = 0x10000, scoped, tag = 'scoped mem for input reshape']
    %s3 = sshllo.u32 0, 4
    %s4 = smul.addr 4, 15
    %s5 = scalar_lea.vmem %s0, %s4
    %v6 = vld [vmem:[%s5] sm:%s3]
    %s7 = scalar_lea.vmem [#allocation0], 120
    %8 = vst [vmem:[%s7] sm:%s3] %v6
    %s9 = smul.addr 4, 14
    %s10 = scalar_lea.vmem %s0, %s9
    %v11 = vld [vmem:[%s10] sm:%s3]
    %s12 = scalar_lea.vmem [#allocation0], 112
    %13 = vst [vmem:[%s12] sm:%s3] %v11
    %s14 = smul.addr 4, 13
    %s15 = scalar_lea.vmem %s0, %s14
    %v16 = vld [vmem:[%s15] sm:%s3]
    %s17 = scalar_lea.vmem [#allocation0], 104
    %18 = vst [vmem:[%s17] sm:%s3] %v16
    %s19 = smul.addr 4, 12
    %s20 = scalar_lea.vmem %s0, %s19
    %v21 = vld [vmem:[%s20] sm:%s3]
    %s22 = scalar_lea.vmem [#allocation0], 96
    %23 = vst [vmem:[%s22] sm:%s3] %v21
    %s24 = smul.addr 4, 11
    %s25 = scalar_lea.vmem %s0, %s24
    %v26 = vld [vmem:[%s25] sm:%s3]
    %s27 = scalar_lea.vmem [#allocation0], 88
    %28 = vst [vmem:[%s27] sm:%s3] %v26
    %s29 = smul.addr 4, 10
    %s30 = scalar_lea.vmem %s0, %s29
    %v31 = vld [vmem:[%s30] sm:%s3]
    %s32 = scalar_lea.vmem [#allocation0], 80
    %33 = vst [vmem:[%s32] sm:%s3] %v31
    %s34 = smul.addr 4, 9
    %s35 = scalar_lea.vmem %s0, %s34
    %v36 = vld [vmem:[%s35] sm:%s3]
    %s37 = scalar_lea.vmem [#allocation0], 72
    %38 = vst [vmem:[%s37] sm:%s3] %v36
    %s39 = smul.addr 4, 8
    %s40 = scalar_lea.vmem %s0, %s39
    %v41 = vld [vmem:[%s40] sm:%s3]
    %s42 = scalar_lea.vmem [#allocation0], 64
    %43 = vst [vmem:[%s42] sm:%s3] %v41
    %s44 = smul.addr 4, 7
    %s45 = scalar_lea.vmem %s0, %s44
    %v46 = vld [vmem:[%s45] sm:%s3]
    %s47 = scalar_lea.vmem [#allocation0], 56
    %48 = vst [vmem:[%s47] sm:%s3] %v46
    %s49 = smul.addr 4, 6
    %s50 = scalar_lea.vmem %s0, %s49
    %v51 = vld [vmem:[%s50] sm:%s3]
    %s52 = scalar_lea.vmem [#allocation0], 48
    %53 = vst [vmem:[%s52] sm:%s3] %v51
    %s54 = smul.addr 4, 5
    %s55 = scalar_lea.vmem %s0, %s54
    %v56 = vld [vmem:[%s55] sm:%s3]
    %s57 = scalar_lea.vmem [#allocation0], 40
    %58 = vst [vmem:[%s57] sm:%s3] %v56
    %s59 = smul.addr 4, 4
    %s60 = scalar_lea.vmem %s0, %s59
    %v61 = vld [vmem:[%s60] sm:%s3]
    %s62 = scalar_lea.vmem [#allocation0], 32
    %63 = vst [vmem:[%s62] sm:%s3] %v61
    %s64 = smul.addr 4, 3
    %s65 = scalar_lea.vmem %s0, %s64
    %v66 = vld [vmem:[%s65] sm:%s3]
    %s67 = scalar_lea.vmem [#allocation0], 24
    %68 = vst [vmem:[%s67] sm:%s3] %v66
    %s69 = smul.addr 4, 2
    %s70 = scalar_lea.vmem %s0, %s69
    %v71 = vld [vmem:[%s70] sm:%s3]
    %s72 = scalar_lea.vmem [#allocation0], 16
    %73 = vst [vmem:[%s72] sm:%s3] %v71
    %s74 = scalar_lea.vmem %s0, 4
    %v75 = vld [vmem:[%s74] sm:%s3]
    %s76 = scalar_lea.vmem [#allocation0], 8
    %77 = vst [vmem:[%s76] sm:%s3] %v75
    %v78 = vld [vmem:[%s0] sm:%s3]
    %79 = vst [vmem:[#allocation0] sm:%s3] %v78
    %v80 = vld [vmem:[#allocation0] ss:$8 sm:$0xf]
    %v81 = vld [vmem:[#allocation0] ss:$8 sm:$0xf0]
    %vm82 = vcmask 1047556
    %v83 = vsel %vm82, %v81, %v80
    %vm84 = vcmask 130048
    %85 = vst.msk [vmem:[%s1] sm:$0xff] %vm84, %v83
    %s86 = scalar_lea.vmem [#allocation0], 64
    %v87 = vld [vmem:[%s86] ss:$8 sm:$0xf]
    %s88 = scalar_lea.vmem [#allocation0], 64
    %v89 = vld [vmem:[%s88] ss:$8 sm:$0xf0]
    %vm90 = vcmask 1047556
    %v91 = vsel %vm90, %v89, %v87
    %vm92 = vcmask 130048
    %s93 = scalar_lea.vmem %s1, 8
    %94 = vst.msk [vmem:[%s93] sm:$0xff] %vm92, %v91
    %s95 = scalar_lea.vmem [#allocation0], 3
    %v96 = vld [vmem:[%s95] ss:$8 sm:$0xf]
    %s97 = scalar_lea.vmem [#allocation0], 3
    %v98 = vld [vmem:[%s97] ss:$8 sm:$0xf0]
    %vm99 = vcmask 1047556
    %v100 = vsel %vm99, %v98, %v96
    %101 = vrot.lane.b32.xlu0 %v100, 48
    %v102 = vpop.permute.xlu0 %101
    %vm103 = vcmask 523648
    %104 = vst.msk [vmem:[%s1] sm:$0xff] %vm103, %v102
    %s105 = scalar_lea.vmem [#allocation0], 67
    %v106 = vld [vmem:[%s105] ss:$8 sm:$0xf]
    %s107 = scalar_lea.vmem [#allocation0], 67
    %v108 = vld [vmem:[%s107] ss:$8 sm:$0xf0]
    %vm109 = vcmask 1047556
    %v110 = vsel %vm109, %v108, %v106
    %111 = vrot.lane.b32.xlu0 %v110, 48
    %v112 = vpop.permute.xlu0 %111
    %vm113 = vcmask 523648
    %s114 = scalar_lea.vmem %s1, 8
    %115 = vst.msk [vmem:[%s114] sm:$0xff] %vm113, %v112
    %s116 = scalar_lea.vmem [#allocation0], 2
    %v117 = vld [vmem:[%s116] ss:$8 sm:$0xf]
    %s118 = scalar_lea.vmem [#allocation0], 2
    %v119 = vld [vmem:[%s118] ss:$8 sm:$0xf0]
    %vm120 = vcmask 1047556
    %v121 = vsel %vm120, %v119, %v117
    %122 = vrot.lane.b32.xlu0 %v121, 32
    %v123 = vpop.permute.xlu0 %122
    %vm124 = vcmask 392448
    %125 = vst.msk [vmem:[%s1] sm:$0xff] %vm124, %v123
    %s126 = scalar_lea.vmem [#allocation0], 66
    %v127 = vld [vmem:[%s126] ss:$8 sm:$0xf]
    %s128 = scalar_lea.vmem [#allocation0], 66
    %v129 = vld [vmem:[%s128] ss:$8 sm:$0xf0]
    %vm130 = vcmask 1047556
    %v131 = vsel %vm130, %v129, %v127
    %132 = vrot.lane.b32.xlu0 %v131, 32
    %v133 = vpop.permute.xlu0 %132
    %vm134 = vcmask 392448
    %s135 = scalar_lea.vmem %s1, 8
    %136 = vst.msk [vmem:[%s135] sm:$0xff] %vm134, %v133
    %s137 = scalar_lea.vmem [#allocation0], 1
    %v138 = vld [vmem:[%s137] ss:$8 sm:$0xf]
    %s139 = scalar_lea.vmem [#allocation0], 1
    %v140 = vld [vmem:[%s139] ss:$8 sm:$0xf0]
    %vm141 = vcmask 1047556
    %v142 = vsel %vm141, %v140, %v138
    %143 = vrot.lane.b32.xlu0 %v142, 16
    %v144 = vpop.permute.xlu0 %143
    %vm145 = vcmask 261248
    %146 = vst.msk [vmem:[%s1] sm:$0xff] %vm145, %v144
    %s147 = scalar_lea.vmem [#allocation0], 65
    %v148 = vld [vmem:[%s147] ss:$8 sm:$0xf]
    %s149 = scalar_lea.vmem [#allocation0], 65
    %v150 = vld [vmem:[%s149] ss:$8 sm:$0xf0]
    %vm151 = vcmask 1047556
    %v152 = vsel %vm151, %v150, %v148
    %153 = vrot.lane.b32.xlu0 %v152, 16
    %v154 = vpop.permute.xlu0 %153
    %vm155 = vcmask 261248
    %s156 = scalar_lea.vmem %s1, 8
    %157 = vst.msk [vmem:[%s156] sm:$0xff] %vm155, %v154

// kernel: gat_net_forward.1
$region0: #{gat_net_forward.1}
  #allocation0 [shape = 'u32[]', space=smem, size = 0x4, offset = 0x4, fixed_abs, tag = 'smem constant byte address 0x4 - core index']
  #allocation1 [shape = 'u32[144,128]{1,0:T(1,128)}', space=vmem, size = 0x12000, scoped, tag = 'internal scratch']
  %s0 = inlined_call_operand.vmem [shape: f32[16,8], index: 0, kind: input, shape index: {}]
  %s1 = inlined_call_operand.vmem [shape: f32[8,16], index: 1, kind: input, shape index: {}]
  %s2 = inlined_call_operand.vmem [shape: f32[16,64], index: 2, kind: input, shape index: {}]
  %s3 = inlined_call_operand.vmem [shape: f32[16,64], index: 3, kind: input, shape index: {}]
  %s4 = inlined_call_operand.vmem [shape: f32[16,64], index: 4, kind: input, shape index: {}]
  %s5 = inlined_call_operand.vmem [shape: f32[4,64], index: 5, kind: input, shape index: {}]
  %s6 = inlined_call_operand.vmem [shape: f32[64,4], index: 6, kind: input, shape index: {}]
  %s7 = inlined_call_operand.vmem [shape: f32[64,16], index: 7, kind: input, shape index: {}]
  %s8 = inlined_call_operand.vmem [shape: f32[64,16], index: 8, kind: input, shape index: {}]
  %s9 = inlined_call_operand.vmem [shape: f32[1,16], index: 9, kind: input, shape index: {}]
  %s10 = inlined_call_operand.vmem [shape: f32[16,64], index: 10, kind: input, shape index: {}]
  %s11 = inlined_call_operand.vmem [shape: f32[16,16], index: 11, kind: input, shape index: {}]
  %s12 = inlined_call_operand.vmem [shape: f32[16,128], index: 12, kind: input, shape index: {}]
  %s13 = inlined_call_operand.vmem [shape: f32[128,1], index: 13, kind: input, shape index: {}]
  %s14 = inlined_call_operand.vmem [shape: f32[128,1], index: 14, kind: input, shape index: {}]
  %s15 = inlined_call_operand.vmem [shape: f32[1,128], index: 15, kind: input, shape index: {}]
  %s16 = inlined_call_operand.vmem [shape: f32[1,128], index: 16, kind: input, shape index: {}]
  %s17 = inlined_call_operand.vmem [shape: f32[16,128], index: 17, kind: output, shape index: {}]
  %s18 = sld [smem:[#allocation0]]
  $region78: #{gat_net_forward.1} parent=0
    _
  %s20 = ssub.s32 1, %s18
  %s21 = scalar_select 0, %s20, %s18
  // Predicated region
  $region2: #{gat_net_forward.1} parent=0 // pred_check
    _
  $region3: #{gat_net_forward.1} parent=0 // pred_check_branch
    %23 = sbr.rel (0) target = $region5
  $region4: #{gat_net_forward.1} parent=0 // pred_region
    _
  $region5: #{gat_net_forward.1} parent=0 // pred_fallthru
    _
  // Predicated region
  $region6: #{gat_net_forward.1} parent=0 // pred_check
    _
  $region7: #{gat_net_forward.1} parent=0 // pred_check_branch
    %25 = sbr.rel (0) target = $region9
  $region8: #{gat_net_forward.1} parent=0 // pred_region
    _
  $region9: #{gat_net_forward.1} parent=0 // pred_fallthru
    _
  // Predicated region
  $region10: #{gat_net_forward.1} parent=0 // pred_check
    _
  $region11: #{gat_net_forward.1} parent=0 // pred_check_branch
    %27 = sbr.rel (0) target = $region13
  $region12: #{gat_net_forward.1} parent=0 // pred_region
    _
  $region13: #{gat_net_forward.1} parent=0 // pred_fallthru
    _
  // Predicated region
  $region14: #{gat_net_forward.1} parent=0 // pred_check
    _
  $region15: #{gat_net_forward.1} parent=0 // pred_check_branch
    %29 = sbr.rel (0) target = $region17
  $region16: #{gat_net_forward.1} parent=0 // pred_region
    _
  $region17: #{gat_net_forward.1} parent=0 // pred_fallthru
    _
  // Predicated region
  $region18: #{gat_net_forward.1} parent=0 // pred_check
    _
  $region19: #{gat_net_forward.1} parent=0 // pred_check_branch
    %31 = sbr.rel (0) target = $region21
  $region20: #{gat_net_forward.1} parent=0 // pred_region
    _
  $region21: #{gat_net_forward.1} parent=0 // pred_fallthru
    _
  // Predicated region
  $region22: #{gat_net_forward.1} parent=0 // pred_check
    _
  $region23: #{gat_net_forward.1} parent=0 // pred_check_branch
    %33 = sbr.rel (0) target = $region25
  $region24: #{gat_net_forward.1} parent=0 // pred_region
    _
  $region25: #{gat_net_forward.1} parent=0 // pred_fallthru
    _
  // Predicated region
  $region26: #{gat_net_forward.1} parent=0 // pred_check
    _
  $region27: #{gat_net_forward.1} parent=0 // pred_check_branch
    %35 = sbr.rel (0) target = $region29
  $region28: #{gat_net_forward.1} parent=0 // pred_region
    _
  $region29: #{gat_net_forward.1} parent=0 // pred_fallthru
    _
  // Predicated region
  $region30: #{gat_net_forward.1} parent=0 // pred_check
    _
  $region31: #{gat_net_forward.1} parent=0 // pred_check_branch
    %37 = sbr.rel (0) target = $region33
  $region32: #{gat_net_forward.1} parent=0 // pred_region
    _
  $region33: #{gat_net_forward.1} parent=0 // pred_fallthru
    _
  // Predicated region
  $region34: #{gat_net_forward.1} parent=0 // pred_check
    _
  $region35: #{gat_net_forward.1} parent=0 // pred_check_branch
    %39 = sbr.rel (0) target = $region37
  $region36: #{gat_net_forward.1} parent=0 // pred_region
    _
  $region37: #{gat_net_forward.1} parent=0 // pred_fallthru
    _
  // Predicated region
  $region38: #{gat_net_forward.1} parent=0 // pred_check
    _
  $region39: #{gat_net_forward.1} parent=0 // pred_check_branch
    %41 = sbr.rel (0) target = $region41
  $region40: #{gat_net_forward.1} parent=0 // pred_region
    _
  $region41: #{gat_net_forward.1} parent=0 // pred_fallthru
    _
  // Predicated region
  $region42: #{gat_net_forward.1} parent=0 // pred_check
    _
  $region43: #{gat_net_forward.1} parent=0 // pred_check_branch
    %43 = sbr.rel (0) target = $region45
  $region44: #{gat_net_forward.1} parent=0 // pred_region
    _
  $region45: #{gat_net_forward.1} parent=0 // pred_fallthru
    _
  // Predicated region
  $region46: #{gat_net_forward.1} parent=0 // pred_check
    _
  $region47: #{gat_net_forward.1} parent=0 // pred_check_branch
    %45 = sbr.rel (0) target = $region49
  $region48: #{gat_net_forward.1} parent=0 // pred_region
    _
  $region49: #{gat_net_forward.1} parent=0 // pred_fallthru
    _
  // Predicated region
  $region50: #{gat_net_forward.1} parent=0 // pred_check
    _
  $region51: #{gat_net_forward.1} parent=0 // pred_check_branch
    %47 = sbr.rel (0) target = $region53
  $region52: #{gat_net_forward.1} parent=0 // pred_region
    _
  $region53: #{gat_net_forward.1} parent=0 // pred_fallthru
    _
  // Predicated region
  $region54: #{gat_net_forward.1} parent=0 // pred_check
    _
  $region55: #{gat_net_forward.1} parent=0 // pred_check_branch
    %49 = sbr.rel (0) target = $region57
  $region56: #{gat_net_forward.1} parent=0 // pred_region
    _
  $region57: #{gat_net_forward.1} parent=0 // pred_fallthru
    _
  // Predicated region
  $region58: #{gat_net_forward.1} parent=0 // pred_check
    _
  $region59: #{gat_net_forward.1} parent=0 // pred_check_branch
    %51 = sbr.rel (0) target = $region61
  $region60: #{gat_net_forward.1} parent=0 // pred_region
    _
  $region61: #{gat_net_forward.1} parent=0 // pred_fallthru
    _
  // Predicated region
  $region62: #{gat_net_forward.1} parent=0 // pred_check
    _
  $region63: #{gat_net_forward.1} parent=0 // pred_check_branch
    %53 = sbr.rel (0) target = $region65
  $region64: #{gat_net_forward.1} parent=0 // pred_region
    _
  $region65: #{gat_net_forward.1} parent=0 // pred_fallthru
    _
  // Predicated region
  $region66: #{gat_net_forward.1} parent=0 // pred_check
    _
  $region67: #{gat_net_forward.1} parent=0 // pred_check_branch
    %55 = sbr.rel (0) target = $region69
  $region68: #{gat_net_forward.1} parent=0 // pred_region
    _
  $region69: #{gat_net_forward.1} parent=0 // pred_fallthru
    _
  %v56 = vld [vmem:[%s0] sm:$0xff]
  %v57 = vld [vmem:[%s0 + $0x8] sm:$0xff]
  %v58 = vld [vmem:[%s1] sm:$0xff]
  %vm59 = vcmask 64512
  %v61 = vsel %vm59, %v56, 0
  %v64 = vsel %vm59, %v57, 0
  %66 = vmatprep.subr.mxu0 0.0
  %67 = vmatpush1.msra.mxu0 %v58
  %68 = vmatprep.subr.mxu0 0.0
  %69 = vmatpush1.msra.mxu0 0.0
  %70 = vmatprep.subr.mxu0 0.0
  %71 = vmatpush1.msra.mxu0 0.0
  %72 = vmatprep.subr.mxu0 0.0
  %73 = vmatpush1.msra.mxu0 0.0
  %74 = vmatprep.subr.mxu0 0.0
  %75 = vmatpush1.msra.mxu0 0.0
  %76 = vmatprep.subr.mxu0 0.0
  %77 = vmatpush1.msra.mxu0 0.0
  %78 = vmatprep.subr.mxu0 0.0
  %79 = vmatpush1.msra.mxu0 0.0
  %80 = vmatprep.subr.mxu0 0.0
  %81 = vmatpush1.msra.mxu0 0.0
  %82 = vmatprep.subr.mxu0 0.0
  %83 = vmatpush1.msra.mxu0 0.0
  %84 = vmatprep.subr.mxu0 0.0
  %85 = vmatpush1.msra.mxu0 0.0
  %86 = vmatprep.subr.mxu0 0.0
  %87 = vmatpush1.msra.mxu0 0.0
  %88 = vmatprep.subr.mxu0 0.0
  %89 = vmatpush1.msra.mxu0 0.0
  %90 = vmatprep.subr.mxu0 0.0
  %91 = vmatpush1.msra.mxu0 0.0
  %92 = vmatprep.subr.mxu0 0.0
  %93 = vmatpush1.msra.mxu0 0.0
  %94 = vmatprep.subr.mxu0 0.0
  %95 = vmatpush1.msra.mxu0 0.0
  %96 = vmatprep.subr.mxu0 0.0
  %97 = vmatpush1.msra.mxu0 0.0
  %98 = vmatprep.subr.mxu0 0.0
  %99 = vmatpush1.msra.mxu0 0.0
  %100 = vmatprep.subr.mxu0 0.0
  %101 = vmatpush1.msra.mxu0 0.0
  %102 = vmatprep.subr.mxu0 0.0
  %103 = vmatpush1.msra.mxu0 0.0
  %104 = vmatprep.subr.mxu0 0.0
  %105 = vmatpush1.msra.mxu0 0.0
  %106 = vmatprep.subr.mxu0 0.0
  %107 = vmatpush1.msra.mxu0 0.0
  %108 = vmatprep.subr.mxu0 0.0
  %109 = vmatpush1.msra.mxu0 0.0
  %110 = vmatprep.subr.mxu0 0.0
  %111 = vmatpush1.msra.mxu0 0.0
  %112 = vmatprep.subr.mxu0 0.0
  %113 = vmatpush1.msra.mxu0 0.0
  %114 = vmatprep.subr.mxu0 0.0
  %115 = vmatpush1.msra.mxu0 0.0
  %116 = vmatprep.subr.mxu0 0.0
  %117 = vmatpush1.msra.mxu0 0.0
  %118 = vmatprep.subr.mxu0 0.0
  %119 = vmatpush1.msra.mxu0 0.0
  %120 = vmatprep.subr.mxu0 0.0
  %121 = vmatpush1.msra.mxu0 0.0
  %122 = vmatprep.subr.mxu0 0.0
  %123 = vmatpush1.msra.mxu0 0.0
  %124 = vmatprep.subr.mxu0 0.0
  %125 = vmatpush1.msra.mxu0 0.0
  %126 = vmatprep.subr.mxu0 0.0
  %127 = vmatpush1.msra.mxu0 0.0
  %128 = vmatprep.subr.mxu0 0.0
  %129 = vmatpush1.msra.mxu0 0.0
  %130 = vmatprep.mubr.f32.mxu0 0.0
  %131 = vmatmul.mubr.f32.gmra.mrb[0].mxu0 %v61
  %v132 = vpop.f32.mrb[0].mxu0
  %v133 = vadd.f32 0.0, %v132
  %v134 = vpop.f32.mrb[0].mxu0
  %135 = vmatprep.mubr.f32.mxu0 0.0
  %136 = vmatmul.mubr.f32.gmra.mrb[0].mxu0 %v64
  %v137 = vpop.f32.mrb[0].mxu0
  %v138 = vadd.f32 0.0, %v137
  %v139 = vpop.f32.mrb[0].mxu0
  %140 = vdwg.mxu0
  %v141 = vld [vmem:[%s2] sm:$0xff]
  %v142 = vld [vmem:[%s2 + $0x8] sm:$0xff]
  %v143 = vld [vmem:[%s3] sm:$0xff]
  %v144 = vld [vmem:[%s3 + $0x8] sm:$0xff]
  %vm145 = vcmask 130048
  %v147 = vsel %vm145, %v133, 0
  %v150 = vsel %vm145, %v138, 0
  %152 = vmatprep.subr.mxu0 0.0
  %153 = vmatpush1.msra.mxu0 %v143
  %154 = vmatprep.subr.mxu0 0.0
  %155 = vmatpush1.msra.mxu0 %v144
  %156 = vmatprep.subr.mxu0 0.0
  %157 = vmatpush1.msra.mxu0 0.0
  %158 = vmatprep.subr.mxu0 0.0
  %159 = vmatpush1.msra.mxu0 0.0
  %160 = vmatprep.subr.mxu0 0.0
  %161 = vmatpush1.msra.mxu0 0.0
  %162 = vmatprep.subr.mxu0 0.0
  %163 = vmatpush1.msra.mxu0 0.0
  %164 = vmatprep.subr.mxu0 0.0
  %165 = vmatpush1.msra.mxu0 0.0
  %166 = vmatprep.subr.mxu0 0.0
  %167 = vmatpush1.msra.mxu0 0.0
  %168 = vmatprep.subr.mxu0 0.0
  %169 = vmatpush1.msra.mxu0 0.0
  %170 = vmatprep.subr.mxu0 0.0
  %171 = vmatpush1.msra.mxu0 0.0
  %172 = vmatprep.subr.mxu0 0.0
  %173 = vmatpush1.msra.mxu0 0.0
  %174 = vmatprep.subr.mxu0 0.0
  %175 = vmatpush1.msra.mxu0 0.0
  %176 = vmatprep.subr.mxu0 0.0
  %177 = vmatpush1.msra.mxu0 0.0
  %178 = vmatprep.subr.mxu0 0.0
  %179 = vmatpush1.msra.mxu0 0.0
  %180 = vmatprep.subr.mxu0 0.0
  %181 = vmatpush1.msra.mxu0 0.0
  %182 = vmatprep.subr.mxu0 0.0
  %183 = vmatpush1.msra.mxu0 0.0
  %184 = vmatprep.subr.mxu0 0.0
  %185 = vmatpush1.msra.mxu0 0.0
  %186 = vmatprep.subr.mxu0 0.0
  %187 = vmatpush1.msra.mxu0 0.0
  %188 = vmatprep.subr.mxu0 0.0
  %189 = vmatpush1.msra.mxu0 0.0
  %190 = vmatprep.subr.mxu0 0.0
  %191 = vmatpush1.msra.mxu0 0.0
  %192 = vmatprep.subr.mxu0 0.0
  %193 = vmatpush1.msra.mxu0 0.0
  %194 = vmatprep.subr.mxu0 0.0
  %195 = vmatpush1.msra.mxu0 0.0
  %196 = vmatprep.subr.mxu0 0.0
  %197 = vmatpush1.msra.mxu0 0.0
  %198 = vmatprep.subr.mxu0 0.0
  %199 = vmatpush1.msra.mxu0 0.0
  %200 = vmatprep.subr.mxu0 0.0
  %201 = vmatpush1.msra.mxu0 0.0
  %202 = vmatprep.subr.mxu0 0.0
  %203 = vmatpush1.msra.mxu0 0.0
  %204 = vmatprep.subr.mxu0 0.0
  %205 = vmatpush1.msra.mxu0 0.0
  %206 = vmatprep.subr.mxu0 0.0
  %207 = vmatpush1.msra.mxu0 0.0
  %208 = vmatprep.subr.mxu0 0.0
  %209 = vmatpush1.msra.mxu0 0.0
  %210 = vmatprep.subr.mxu0 0.0
  %211 = vmatpush1.msra.mxu0 0.0
  %212 = vmatprep.subr.mxu0 0.0
  %213 = vmatpush1.msra.mxu0 0.0
  %214 = vmatprep.subr.mxu0 0.0
  %215 = vmatpush1.msra.mxu0 0.0
  %216 = vmatprep.mubr.f32.mxu0 0.0
  %217 = vmatmul.mubr.f32.gmra.mrb[0].mxu0 %v147
  %v218 = vpop.f32.mrb[0].mxu0
  %v219 = vadd.f32 0.0, %v218
  %v220 = vpop.f32.mrb[0].mxu0
  %221 = vmatprep.mubr.f32.mxu0 0.0
  %222 = vmatmul.mubr.f32.gmra.mrb[0].mxu0 %v150
  %v223 = vpop.f32.mrb[0].mxu0
  %v224 = vadd.f32 0.0, %v223
  %v225 = vpop.f32.mrb[0].mxu0
  %226 = vdwg.mxu0
  %v227 = vld [vmem:[%s4] sm:$0xff]
  %v228 = vld [vmem:[%s4 + $0x8] sm:$0xff]
  %v229 = vmul.f32 %v219, %v227
  %v230 = vmul.f32 %v224, %v228
  %v232 = vsel %vm145, 1.0, 0
  %234 = vmatprep.subr.mxu0 0.0
  %235 = vmatpush1.msra.mxu0 %v229
  %236 = vmatprep.subr.mxu0 0.0
  %237 = vmatpush1.msra.mxu0 %v230
  %238 = vmatprep.subr.mxu0 0.0
  %239 = vmatpush1.msra.mxu0 0.0
  %240 = vmatprep.subr.mxu0 0.0
  %241 = vmatpush1.msra.mxu0 0.0
  %242 = vmatprep.subr.mxu0 0.0
  %243 = vmatpush1.msra.mxu0 0.0
  %244 = vmatprep.subr.mxu0 0.0
  %245 = vmatpush1.msra.mxu0 0.0
  %246 = vmatprep.subr.mxu0 0.0
  %247 = vmatpush1.msra.mxu0 0.0
  %248 = vmatprep.subr.mxu0 0.0
  %249 = vmatpush1.msra.mxu0 0.0
  %250 = vmatprep.subr.mxu0 0.0
  %251 = vmatpush1.msra.mxu0 0.0
  %252 = vmatprep.subr.mxu0 0.0
  %253 = vmatpush1.msra.mxu0 0.0
  %254 = vmatprep.subr.mxu0 0.0
  %255 = vmatpush1.msra.mxu0 0.0
  %256 = vmatprep.subr.mxu0 0.0
  %257 = vmatpush1.msra.mxu0 0.0
  %258 = vmatprep.subr.mxu0 0.0
  %259 = vmatpush1.msra.mxu0 0.0
  %260 = vmatprep.subr.mxu0 0.0
  %261 = vmatpush1.msra.mxu0 0.0
  %262 = vmatprep.subr.mxu0 0.0
  %263 = vmatpush1.msra.mxu0 0.0
  %264 = vmatprep.subr.mxu0 0.0
  %265 = vmatpush1.msra.mxu0 0.0
  %266 = vmatprep.subr.mxu0 0.0
  %267 = vmatpush1.msra.mxu0 0.0
  %268 = vmatprep.subr.mxu0 0.0
  %269 = vmatpush1.msra.mxu0 0.0
  %270 = vmatprep.subr.mxu0 0.0
  %271 = vmatpush1.msra.mxu0 0.0
  %272 = vmatprep.subr.mxu0 0.0
  %273 = vmatpush1.msra.mxu0 0.0
  %274 = vmatprep.subr.mxu0 0.0
  %275 = vmatpush1.msra.mxu0 0.0
  %276 = vmatprep.subr.mxu0 0.0
  %277 = vmatpush1.msra.mxu0 0.0
  %278 = vmatprep.subr.mxu0 0.0
  %279 = vmatpush1.msra.mxu0 0.0
  %280 = vmatprep.subr.mxu0 0.0
  %281 = vmatpush1.msra.mxu0 0.0
  %282 = vmatprep.subr.mxu0 0.0
  %283 = vmatpush1.msra.mxu0 0.0
  %284 = vmatprep.subr.mxu0 0.0
  %285 = vmatpush1.msra.mxu0 0.0
  %286 = vmatprep.subr.mxu0 0.0
  %287 = vmatpush1.msra.mxu0 0.0
  %288 = vmatprep.subr.mxu0 0.0
  %289 = vmatpush1.msra.mxu0 0.0
  %290 = vmatprep.subr.mxu0 0.0
  %291 = vmatpush1.msra.mxu0 0.0
  %292 = vmatprep.subr.mxu0 0.0
  %293 = vmatpush1.msra.mxu0 0.0
  %294 = vmatprep.subr.mxu0 0.0
  %295 = vmatpush1.msra.mxu0 0.0
  %296 = vmatprep.subr.mxu0 0.0
  %297 = vmatpush1.msra.mxu0 0.0
  %298 = vmatprep.mubr.f32.mxu0 0.0
  %299 = vmatmul.mubr.f32.gmra.mrb[0].mxu0 %v232
  %v300 = vpop.f32.mrb[0].mxu0
  %v301 = vadd.f32 0.0, %v300
  %v302 = vpop.f32.mrb[0].mxu0
  %303 = vdwg.mxu0
  %v304 = vlaneseq
  %v305 = vshrl.u32 %v304, 7
  %v306 = vsub.s32 0, %v305
  %v307 = vrot.slane %v301, %v306
  %308 = vmatprep.subr.mxu0 0.0
  %309 = vmatpush1.msra.mxu0 %v141
  %310 = vmatprep.subr.mxu0 0.0
  %311 = vmatpush1.msra.mxu0 %v142
  %312 = vmatprep.subr.mxu0 0.0
  %313 = vmatpush1.msra.mxu0 0.0
  %314 = vmatprep.subr.mxu0 0.0
  %315 = vmatpush1.msra.mxu0 0.0
  %316 = vmatprep.subr.mxu0 0.0
  %317 = vmatpush1.msra.mxu0 0.0
  %318 = vmatprep.subr.mxu0 0.0
  %319 = vmatpush1.msra.mxu0 0.0
  %320 = vmatprep.subr.mxu0 0.0
  %321 = vmatpush1.msra.mxu0 0.0
  %322 = vmatprep.subr.mxu0 0.0
  %323 = vmatpush1.msra.mxu0 0.0
  %324 = vmatprep.subr.mxu0 0.0
  %325 = vmatpush1.msra.mxu0 0.0
  %326 = vmatprep.subr.mxu0 0.0
  %327 = vmatpush1.msra.mxu0 0.0
  %328 = vmatprep.subr.mxu0 0.0
  %329 = vmatpush1.msra.mxu0 0.0
  %330 = vmatprep.subr.mxu0 0.0
  %331 = vmatpush1.msra.mxu0 0.0
  %332 = vmatprep.subr.mxu0 0.0
  %333 = vmatpush1.msra.mxu0 0.0
  %334 = vmatprep.subr.mxu0 0.0
  %335 = vmatpush1.msra.mxu0 0.0
  %336 = vmatprep.subr.mxu0 0.0
  %337 = vmatpush1.msra.mxu0 0.0
  %338 = vmatprep.subr.mxu0 0.0
  %339 = vmatpush1.msra.mxu0 0.0
  %340 = vmatprep.subr.mxu0 0.0
  %341 = vmatpush1.msra.mxu0 0.0
  %342 = vmatprep.subr.mxu0 0.0
  %343 = vmatpush1.msra.mxu0 0.0
  %344 = vmatprep.subr.mxu0 0.0
  %345 = vmatpush1.msra.mxu0 0.0
  %346 = vmatprep.subr.mxu0 0.0
  %347 = vmatpush1.msra.mxu0 0.0
  %348 = vmatprep.subr.mxu0 0.0
  %349 = vmatpush1.msra.mxu0 0.0
  %350 = vmatprep.subr.mxu0 0.0
  %351 = vmatpush1.msra.mxu0 0.0
  %352 = vmatprep.subr.mxu0 0.0
  %353 = vmatpush1.msra.mxu0 0.0
  %354 = vmatprep.subr.mxu0 0.0
  %355 = vmatpush1.msra.mxu0 0.0
  %356 = vmatprep.subr.mxu0 0.0
  %357 = vmatpush1.msra.mxu0 0.0
  %358 = vmatprep.subr.mxu0 0.0
  %359 = vmatpush1.msra.mxu0 0.0
  %360 = vmatprep.subr.mxu0 0.0
  %361 = vmatpush1.msra.mxu0 0.0
  %362 = vmatprep.subr.mxu0 0.0
  %363 = vmatpush1.msra.mxu0 0.0
  %364 = vmatprep.subr.mxu0 0.0
  %365 = vmatpush1.msra.mxu0 0.0
  %366 = vmatprep.subr.mxu0 0.0
  %367 = vmatpush1.msra.mxu0 0.0
  %368 = vmatprep.subr.mxu0 0.0
  %369 = vmatpush1.msra.mxu0 0.0
  %370 = vmatprep.subr.mxu0 0.0
  %371 = vmatpush1.msra.mxu0 0.0
  %372 = vmatprep.mubr.f32.mxu0 0.0
  %373 = vmatmul.mubr.f32.gmra.mrb[0].mxu0 %v147
  %v374 = vpop.f32.mrb[0].mxu0
  %v375 = vadd.f32 %v307, %v374
  %v376 = vpop.f32.mrb[0].mxu0
  %377 = vmatprep.mubr.f32.mxu0 0.0
  %378 = vmatmul.mubr.f32.gmra.mrb[0].mxu0 %v150
  %v379 = vpop.f32.mrb[0].mxu0
  %v380 = vadd.f32 %v307, %v379
  %v381 = vpop.f32.mrb[0].mxu0
  %382 = vdwg.mxu0
  %vm383 = vcmp.ge.f32.partialorder %v375, 0.0
  %vm384 = vcmp.ge.f32.partialorder %v380, 0.0
  %v385 = vmul.f32 %v375, 0.2
  %v386 = vmul.f32 %v380, 0.2
  %v387 = vsel %vm383, %v375, %v385
  %v388 = vsel %vm384, %v380, %v386
  %v389 = vld [vmem:[%s10] sm:$0xff]
  %v390 = vld [vmem:[%s10 + $0x8] sm:$0xff]
  %v391 = vadd.f32 %v387, %v389
  %v392 = vadd.f32 %v388, %v390
  %vm393 = vcmask 523264
  %v394 = vsel %vm393, %v391, -inf
  %395 = vmax.xlane.f32.xlu0 %v394
  %v396 = vpop.xlane.xlu0 %395
  %v397 = vsel %vm393, %v392, -inf
  %398 = vmax.xlane.f32.xlu0 %v397
  %v399 = vpop.xlane.xlu0 %398
  %v400 = vsub.f32 %v391, %v396
  %v401 = vsub.f32 %v392, %v399
  %v402 = vmul.f32 %v400, 1.442695
  %v403 = vpow.pop %v402
  %v404 = vmul.f32 %v401, 1.442695
  %v405 = vpow.pop %v404
  %v406 = vld [vmem:[%s6] sm:$0xff]
  %v407 = vld [vmem:[%s6 + $0x8] sm:$0xff]
  %v408 = vld [vmem:[%s6 + $0x10] sm:$0xff]
  %v409 = vld [vmem:[%s6 + $0x18] sm:$0xff]
  %v410 = vld [vmem:[%s6 + $0x20] sm:$0xff]
  %v411 = vld [vmem:[%s6 + $0x28] sm:$0xff]
  %v412 = vld [vmem:[%s6 + $0x30] sm:$0xff]
  %v413 = vld [vmem:[%s6 + $0x38] sm:$0xff]
  %v415 = vsel %vm393, %v403, 0
  %v418 = vsel %vm393, %v405, 0
  %420 = vmatprep.subr.mxu0 0.0
  %421 = vmatpush1.msra.mxu0 %v406
  %422 = vmatprep.subr.mxu0 0.0
  %423 = vmatpush1.msra.mxu0 %v407
  %424 = vmatprep.subr.mxu0 0.0
  %425 = vmatpush1.msra.mxu0 %v408
  %426 = vmatprep.subr.mxu0 0.0
  %427 = vmatpush1.msra.mxu0 %v409
  %428 = vmatprep.subr.mxu0 0.0
  %429 = vmatpush1.msra.mxu0 %v410
  %430 = vmatprep.subr.mxu0 0.0
  %431 = vmatpush1.msra.mxu0 %v411
  %432 = vmatprep.subr.mxu0 0.0
  %433 = vmatpush1.msra.mxu0 %v412
  %434 = vmatprep.subr.mxu0 0.0
  %435 = vmatpush1.msra.mxu0 %v413
  %436 = vmatprep.subr.mxu0 0.0
  %437 = vmatpush1.msra.mxu0 0.0
  %438 = vmatprep.subr.mxu0 0.0
  %439 = vmatpush1.msra.mxu0 0.0
  %440 = vmatprep.subr.mxu0 0.0
  %441 = vmatpush1.msra.mxu0 0.0
  %442 = vmatprep.subr.mxu0 0.0
  %443 = vmatpush1.msra.mxu0 0.0
  %444 = vmatprep.subr.mxu0 0.0
  %445 = vmatpush1.msra.mxu0 0.0
  %446 = vmatprep.subr.mxu0 0.0
  %447 = vmatpush1.msra.mxu0 0.0
  %448 = vmatprep.subr.mxu0 0.0
  %449 = vmatpush1.msra.mxu0 0.0
  %450 = vmatprep.subr.mxu0 0.0
  %451 = vmatpush1.msra.mxu0 0.0
  %452 = vmatprep.subr.mxu0 0.0
  %453 = vmatpush1.msra.mxu0 0.0
  %454 = vmatprep.subr.mxu0 0.0
  %455 = vmatpush1.msra.mxu0 0.0
  %456 = vmatprep.subr.mxu0 0.0
  %457 = vmatpush1.msra.mxu0 0.0
  %458 = vmatprep.subr.mxu0 0.0
  %459 = vmatpush1.msra.mxu0 0.0
  %460 = vmatprep.subr.mxu0 0.0
  %461 = vmatpush1.msra.mxu0 0.0
  %462 = vmatprep.subr.mxu0 0.0
  %463 = vmatpush1.msra.mxu0 0.0
  %464 = vmatprep.subr.mxu0 0.0
  %465 = vmatpush1.msra.mxu0 0.0
  %466 = vmatprep.subr.mxu0 0.0
  %467 = vmatpush1.msra.mxu0 0.0
  %468 = vmatprep.subr.mxu0 0.0
  %469 = vmatpush1.msra.mxu0 0.0
  %470 = vmatprep.subr.mxu0 0.0
  %471 = vmatpush1.msra.mxu0 0.0
  %472 = vmatprep.subr.mxu0 0.0
  %473 = vmatpush1.msra.mxu0 0.0
  %474 = vmatprep.subr.mxu0 0.0
  %475 = vmatpush1.msra.mxu0 0.0
  %476 = vmatprep.subr.mxu0 0.0
  %477 = vmatpush1.msra.mxu0 0.0
  %478 = vmatprep.subr.mxu0 0.0
  %479 = vmatpush1.msra.mxu0 0.0
  %480 = vmatprep.subr.mxu0 0.0
  %481 = vmatpush1.msra.mxu0 0.0
  %482 = vmatprep.subr.mxu0 0.0
  %483 = vmatpush1.msra.mxu0 0.0
  %484 = vmatprep.mubr.f32.mxu0 0.0
  %485 = vmatmul.mubr.f32.gmra.mrb[0].mxu0 %v415
  %v486 = vpop.f32.mrb[0].mxu0
  %v487 = vadd.f32 0.0, %v486
  %v488 = vpop.f32.mrb[0].mxu0
  %489 = vmatprep.mubr.f32.mxu0 0.0
  %490 = vmatmul.mubr.f32.gmra.mrb[0].mxu0 %v418
  %v491 = vpop.f32.mrb[0].mxu0
  %v492 = vadd.f32 0.0, %v491
  %v493 = vpop.f32.mrb[0].mxu0
  %494 = vdwg.mxu0
  %v495 = vmax.f32 %v487, 1e-30
  %v496 = vmax.f32 %v492, 1e-30
  %v497 = vrcp.pop %v495
  %v498 = vrcp.pop %v496
  %v499 = vld [vmem:[%s5] sm:$0xf]
  %vm500 = vcmask 31744
  %v502 = vsel %vm500, %v497, 0
  %v505 = vsel %vm500, %v498, 0
  %vm507 = vcmask 1043456
  %v509 = vsel %vm507, %v499, 0
  %511 = vmatprep.subr.mxu0 0.0
  %512 = vmatpush1.msra.mxu0 %v509
  %513 = vmatprep.subr.mxu0 0.0
  %514 = vmatpush1.msra.mxu0 0.0
  %515 = vmatprep.subr.mxu0 0.0
  %516 = vmatpush1.msra.mxu0 0.0
  %517 = vmatprep.subr.mxu0 0.0
  %518 = vmatpush1.msra.mxu0 0.0
  %519 = vmatprep.subr.mxu0 0.0
  %520 = vmatpush1.msra.mxu0 0.0
  %521 = vmatprep.subr.mxu0 0.0
  %522 = vmatpush1.msra.mxu0 0.0
  %523 = vmatprep.subr.mxu0 0.0
  %524 = vmatpush1.msra.mxu0 0.0
  %525 = vmatprep.subr.mxu0 0.0
  %526 = vmatpush1.msra.mxu0 0.0
  %527 = vmatprep.subr.mxu0 0.0
  %528 = vmatpush1.msra.mxu0 0.0
  %529 = vmatprep.subr.mxu0 0.0
  %530 = vmatpush1.msra.mxu0 0.0
  %531 = vmatprep.subr.mxu0 0.0
  %532 = vmatpush1.msra.mxu0 0.0
  %533 = vmatprep.subr.mxu0 0.0
  %534 = vmatpush1.msra.mxu0 0.0
  %535 = vmatprep.subr.mxu0 0.0
  %536 = vmatpush1.msra.mxu0 0.0
  %537 = vmatprep.subr.mxu0 0.0
  %538 = vmatpush1.msra.mxu0 0.0
  %539 = vmatprep.subr.mxu0 0.0
  %540 = vmatpush1.msra.mxu0 0.0
  %541 = vmatprep.subr.mxu0 0.0
  %542 = vmatpush1.msra.mxu0 0.0
  %543 = vmatprep.subr.mxu0 0.0
  %544 = vmatpush1.msra.mxu0 0.0
  %545 = vmatprep.subr.mxu0 0.0
  %546 = vmatpush1.msra.mxu0 0.0
  %547 = vmatprep.subr.mxu0 0.0
  %548 = vmatpush1.msra.mxu0 0.0
  %549 = vmatprep.subr.mxu0 0.0
  %550 = vmatpush1.msra.mxu0 0.0
  %551 = vmatprep.subr.mxu0 0.0
  %552 = vmatpush1.msra.mxu0 0.0
  %553 = vmatprep.subr.mxu0 0.0
  %554 = vmatpush1.msra.mxu0 0.0
  %555 = vmatprep.subr.mxu0 0.0
  %556 = vmatpush1.msra.mxu0 0.0
  %557 = vmatprep.subr.mxu0 0.0
  %558 = vmatpush1.msra.mxu0 0.0
  %559 = vmatprep.subr.mxu0 0.0
  %560 = vmatpush1.msra.mxu0 0.0
  %561 = vmatprep.subr.mxu0 0.0
  %562 = vmatpush1.msra.mxu0 0.0
  %563 = vmatprep.subr.mxu0 0.0
  %564 = vmatpush1.msra.mxu0 0.0
  %565 = vmatprep.subr.mxu0 0.0
  %566 = vmatpush1.msra.mxu0 0.0
  %567 = vmatprep.subr.mxu0 0.0
  %568 = vmatpush1.msra.mxu0 0.0
  %569 = vmatprep.subr.mxu0 0.0
  %570 = vmatpush1.msra.mxu0 0.0
  %571 = vmatprep.subr.mxu0 0.0
  %572 = vmatpush1.msra.mxu0 0.0
  %573 = vmatprep.subr.mxu0 0.0
  %574 = vmatpush1.msra.mxu0 0.0
  %575 = vmatprep.mubr.f32.mxu0 0.0
  %576 = vmatmul.mubr.f32.gmra.mrb[0].mxu0 %v502
  %v577 = vpop.f32.mrb[0].mxu0
  %v578 = vadd.f32 0.0, %v577
  %v579 = vpop.f32.mrb[0].mxu0
  %580 = vmatprep.mubr.f32.mxu0 0.0
  %581 = vmatmul.mubr.f32.gmra.mrb[0].mxu0 %v505
  %v582 = vpop.f32.mrb[0].mxu0
  %v583 = vadd.f32 0.0, %v582
  %v584 = vpop.f32.mrb[0].mxu0
  %585 = vdwg.mxu0
  %v586 = vmul.f32 %v403, %v578
  %v587 = vmul.f32 %v405, %v583
  %v588 = vld [vmem:[%s8] sm:$0xff]
  %v589 = vld [vmem:[%s8 + $0x8] sm:$0xff]
  %v590 = vld [vmem:[%s8 + $0x10] sm:$0xff]
  %v591 = vld [vmem:[%s8 + $0x18] sm:$0xff]
  %v592 = vld [vmem:[%s8 + $0x20] sm:$0xff]
  %v593 = vld [vmem:[%s8 + $0x28] sm:$0xff]
  %v594 = vld [vmem:[%s8 + $0x30] sm:$0xff]
  %v595 = vld [vmem:[%s8 + $0x38] sm:$0xff]
  %v596 = vld [vmem:[%s7] sm:$0xff]
  %v597 = vld [vmem:[%s7 + $0x8] sm:$0xff]
  %v598 = vld [vmem:[%s7 + $0x10] sm:$0xff]
  %v599 = vld [vmem:[%s7 + $0x18] sm:$0xff]
  %v600 = vld [vmem:[%s7 + $0x20] sm:$0xff]
  %v601 = vld [vmem:[%s7 + $0x28] sm:$0xff]
  %v602 = vld [vmem:[%s7 + $0x30] sm:$0xff]
  %v603 = vld [vmem:[%s7 + $0x38] sm:$0xff]
  %v605 = vsel %vm145, %v596, 0
  %v608 = vsel %vm145, %v597, 0
  %v611 = vsel %vm145, %v598, 0
  %v614 = vsel %vm145, %v599, 0
  %v617 = vsel %vm145, %v600, 0
  %v620 = vsel %vm145, %v601, 0
  %v623 = vsel %vm145, %v602, 0
  %v626 = vsel %vm145, %v603, 0
  %628 = vmatprep.subr.mxu0 0.0
  %629 = vmatpush1.msra.mxu0 %v133
  %630 = vmatprep.subr.mxu0 0.0
  %631 = vmatpush1.msra.mxu0 %v138
  %632 = vmatprep.subr.mxu0 0.0
  %633 = vmatpush1.msra.mxu0 0.0
  %634 = vmatprep.subr.mxu0 0.0
  %635 = vmatpush1.msra.mxu0 0.0
  %636 = vmatprep.subr.mxu0 0.0
  %637 = vmatpush1.msra.mxu0 0.0
  %638 = vmatprep.subr.mxu0 0.0
  %639 = vmatpush1.msra.mxu0 0.0
  %640 = vmatprep.subr.mxu0 0.0
  %641 = vmatpush1.msra.mxu0 0.0
  %642 = vmatprep.subr.mxu0 0.0
  %643 = vmatpush1.msra.mxu0 0.0
  %644 = vmatprep.subr.mxu0 0.0
  %645 = vmatpush1.msra.mxu0 0.0
  %646 = vmatprep.subr.mxu0 0.0
  %647 = vmatpush1.msra.mxu0 0.0
  %648 = vmatprep.subr.mxu0 0.0
  %649 = vmatpush1.msra.mxu0 0.0
  %650 = vmatprep.subr.mxu0 0.0
  %651 = vmatpush1.msra.mxu0 0.0
  %652 = vmatprep.subr.mxu0 0.0
  %653 = vmatpush1.msra.mxu0 0.0
  %654 = vmatprep.subr.mxu0 0.0
  %655 = vmatpush1.msra.mxu0 0.0
  %656 = vmatprep.subr.mxu0 0.0
  %657 = vmatpush1.msra.mxu0 0.0
  %658 = vmatprep.subr.mxu0 0.0
  %659 = vmatpush1.msra.mxu0 0.0
  %660 = vmatprep.subr.mxu0 0.0
  %661 = vmatpush1.msra.mxu0 0.0
  %662 = vmatprep.subr.mxu0 0.0
  %663 = vmatpush1.msra.mxu0 0.0
  %664 = vmatprep.subr.mxu0 0.0
  %665 = vmatpush1.msra.mxu0 0.0
  %666 = vmatprep.subr.mxu0 0.0
  %667 = vmatpush1.msra.mxu0 0.0
  %668 = vmatprep.subr.mxu0 0.0
  %669 = vmatpush1.msra.mxu0 0.0
  %670 = vmatprep.subr.mxu0 0.0
  %671 = vmatpush1.msra.mxu0 0.0
  %672 = vmatprep.subr.mxu0 0.0
  %673 = vmatpush1.msra.mxu0 0.0
  %674 = vmatprep.subr.mxu0 0.0
  %675 = vmatpush1.msra.mxu0 0.0
  %676 = vmatprep.subr.mxu0 0.0
  %677 = vmatpush1.msra.mxu0 0.0
  %678 = vmatprep.subr.mxu0 0.0
  %679 = vmatpush1.msra.mxu0 0.0
  %680 = vmatprep.subr.mxu0 0.0
  %681 = vmatpush1.msra.mxu0 0.0
  %682 = vmatprep.subr.mxu0 0.0
  %683 = vmatpush1.msra.mxu0 0.0
  %684 = vmatprep.subr.mxu0 0.0
  %685 = vmatpush1.msra.mxu0 0.0
  %686 = vmatprep.subr.mxu0 0.0
  %687 = vmatpush1.msra.mxu0 0.0
  %688 = vmatprep.subr.mxu0 0.0
  %689 = vmatpush1.msra.mxu0 0.0
  %690 = vmatprep.subr.mxu0 0.0
  %691 = vmatpush1.msra.mxu0 0.0
  %692 = vmatprep.mubr.f32.mxu0 0.0
  %693 = vmatmul.mubr.f32.gmra.mrb[0].mxu0 %v605
  %v694 = vpop.f32.mrb[0].mxu0
  %v695 = vadd.f32 0.0, %v694
  %v696 = vpop.f32.mrb[0].mxu0
  %697 = vmatprep.mubr.f32.mxu0 0.0
  %698 = vmatmul.mubr.f32.gmra.mrb[0].mxu0 %v608
  %v699 = vpop.f32.mrb[0].mxu0
  %v700 = vadd.f32 0.0, %v699
  %v701 = vpop.f32.mrb[0].mxu0
  %702 = vmatprep.mubr.f32.mxu0 0.0
  %703 = vmatmul.mubr.f32.gmra.mrb[0].mxu0 %v611
  %v704 = vpop.f32.mrb[0].mxu0
  %v705 = vadd.f32 0.0, %v704
  %v706 = vpop.f32.mrb[0].mxu0
  %707 = vmatprep.mubr.f32.mxu0 0.0
  %708 = vmatmul.mubr.f32.gmra.mrb[0].mxu0 %v614
  %v709 = vpop.f32.mrb[0].mxu0
  %v710 = vadd.f32 0.0, %v709
  %v711 = vpop.f32.mrb[0].mxu0
  %712 = vmatprep.mubr.f32.mxu0 0.0
  %713 = vmatmul.mubr.f32.gmra.mrb[0].mxu0 %v617
  %v714 = vpop.f32.mrb[0].mxu0
  %v715 = vadd.f32 0.0, %v714
  %v716 = vpop.f32.mrb[0].mxu0
  %717 = vmatprep.mubr.f32.mxu0 0.0
  %718 = vmatmul.mubr.f32.gmra.mrb[0].mxu0 %v620
  %v719 = vpop.f32.mrb[0].mxu0
  %v720 = vadd.f32 0.0, %v719
  %v721 = vpop.f32.mrb[0].mxu0
  %722 = vmatprep.mubr.f32.mxu0 0.0
  %723 = vmatmul.mubr.f32.gmra.mrb[0].mxu0 %v623
  %v724 = vpop.f32.mrb[0].mxu0
  %v725 = vadd.f32 0.0, %v724
  %v726 = vpop.f32.mrb[0].mxu0
  %727 = vmatprep.mubr.f32.mxu0 0.0
  %728 = vmatmul.mubr.f32.gmra.mrb[0].mxu0 %v626
  %v729 = vpop.f32.mrb[0].mxu0
  %v730 = vadd.f32 0.0, %v729
  %v731 = vpop.f32.mrb[0].mxu0
  %732 = vdwg.mxu0
  %v733 = vmul.f32 %v588, %v695
  %v734 = vmul.f32 %v589, %v700
  %v735 = vmul.f32 %v590, %v705
  %v736 = vmul.f32 %v591, %v710
  %v737 = vmul.f32 %v592, %v715
  %v738 = vmul.f32 %v593, %v720
  %v739 = vmul.f32 %v594, %v725
  %v740 = vmul.f32 %v595, %v730
  %v741 = vld [vmem:[%s9] sm:$0x1]
  %v743 = vlaneseq
  %v744 = vshrl.u32 %v743, 7
  %v745 = vsub.s32 0, %v744
  %v746 = vrot.slane %v741, %v745
  %v749 = vsel %vm393, %v586, 0
  %v752 = vsel %vm393, %v587, 0
  %754 = vmatprep.subr.mxu0 0.0
  %755 = vmatpush1.msra.mxu0 %v733
  %756 = vmatprep.subr.mxu0 0.0
  %757 = vmatpush1.msra.mxu0 %v734
  %758 = vmatprep.subr.mxu0 0.0
  %759 = vmatpush1.msra.mxu0 %v735
  %760 = vmatprep.subr.mxu0 0.0
  %761 = vmatpush1.msra.mxu0 %v736
  %762 = vmatprep.subr.mxu0 0.0
  %763 = vmatpush1.msra.mxu0 %v737
  %764 = vmatprep.subr.mxu0 0.0
  %765 = vmatpush1.msra.mxu0 %v738
  %766 = vmatprep.subr.mxu0 0.0
  %767 = vmatpush1.msra.mxu0 %v739
  %768 = vmatprep.subr.mxu0 0.0
  %769 = vmatpush1.msra.mxu0 %v740
  %770 = vmatprep.subr.mxu0 0.0
  %771 = vmatpush1.msra.mxu0 0.0
  %772 = vmatprep.subr.mxu0 0.0
  %773 = vmatpush1.msra.mxu0 0.0
  %774 = vmatprep.subr.mxu0 0.0
  %775 = vmatpush1.msra.mxu0 0.0
  %776 = vmatprep.subr.mxu0 0.0
  %777 = vmatpush1.msra.mxu0 0.0
  %778 = vmatprep.subr.mxu0 0.0
  %779 = vmatpush1.msra.mxu0 0.0
  %780 = vmatprep.subr.mxu0 0.0
  %781 = vmatpush1.msra.mxu0 0.0
  %782 = vmatprep.subr.mxu0 0.0
  %783 = vmatpush1.msra.mxu0 0.0
  %784 = vmatprep.subr.mxu0 0.0
  %785 = vmatpush1.msra.mxu0 0.0
  %786 = vmatprep.subr.mxu0 0.0
  %787 = vmatpush1.msra.mxu0 0.0
  %788 = vmatprep.subr.mxu0 0.0
  %789 = vmatpush1.msra.mxu0 0.0
  %790 = vmatprep.subr.mxu0 0.0
  %791 = vmatpush1.msra.mxu0 0.0
  %792 = vmatprep.subr.mxu0 0.0
  %793 = vmatpush1.msra.mxu0 0.0
  %794 = vmatprep.subr.mxu0 0.0
  %795 = vmatpush1.msra.mxu0 0.0
  %796 = vmatprep.subr.mxu0 0.0
  %797 = vmatpush1.msra.mxu0 0.0
  %798 = vmatprep.subr.mxu0 0.0
  %799 = vmatpush1.msra.mxu0 0.0
  %800 = vmatprep.subr.mxu0 0.0
  %801 = vmatpush1.msra.mxu0 0.0
  %802 = vmatprep.subr.mxu0 0.0
  %803 = vmatpush1.msra.mxu0 0.0
  %804 = vmatprep.subr.mxu0 0.0
  %805 = vmatpush1.msra.mxu0 0.0
  %806 = vmatprep.subr.mxu0 0.0
  %807 = vmatpush1.msra.mxu0 0.0
  %808 = vmatprep.subr.mxu0 0.0
  %809 = vmatpush1.msra.mxu0 0.0
  %810 = vmatprep.subr.mxu0 0.0
  %811 = vmatpush1.msra.mxu0 0.0
  %812 = vmatprep.subr.mxu0 0.0
  %813 = vmatpush1.msra.mxu0 0.0
  %814 = vmatprep.subr.mxu0 0.0
  %815 = vmatpush1.msra.mxu0 0.0
  %816 = vmatprep.subr.mxu0 0.0
  %817 = vmatpush1.msra.mxu0 0.0
  %818 = vmatprep.mubr.f32.mxu0 0.0
  %819 = vmatmul.mubr.f32.gmra.mrb[0].mxu0 %v749
  %v820 = vpop.f32.mrb[0].mxu0
  %v821 = vadd.f32 %v746, %v820
  %v822 = vpop.f32.mrb[0].mxu0
  %823 = vmatprep.mubr.f32.mxu0 0.0
  %824 = vmatmul.mubr.f32.gmra.mrb[0].mxu0 %v752
  %v825 = vpop.f32.mrb[0].mxu0
  %v826 = vadd.f32 %v746, %v825
  %v827 = vpop.f32.mrb[0].mxu0
  %828 = vdwg.mxu0
  %vm829 = vcmp.gt.f32.partialorder %v821, 0.0
  %vm830 = vcmp.gt.f32.partialorder %v826, 0.0
  %v831 = vmul.f32 %v821, 0.5
  %v832 = vmul.f32 %v826, 0.5
  %v833 = vtanh.pop %v831
  %v834 = vtanh.pop %v832
  %v835 = vmul.f32 %v821, 1.442695
  %v836 = vpow.pop %v835
  %v837 = vmul.f32 %v826, 1.442695
  %v838 = vpow.pop %v837
  %v839 = vadd.f32 %v836, 1.0
  %v840 = vadd.f32 %v838, 1.0
  %v841 = vmul.f32 %v833, %v839
  %v842 = vmul.f32 %v834, %v840
  %v843 = vsel %vm829, %v821, %v841
  %v844 = vsel %vm830, %v826, %v842
  %v845 = vld [vmem:[%s12] sm:$0xff]
  %v846 = vld [vmem:[%s12 + $0x8] sm:$0xff]
  %v848 = vsel %vm145, %v843, 0
  %v851 = vsel %vm145, %v844, 0
  %853 = vmatprep.subr.mxu0 0.0
  %854 = vmatpush1.msra.mxu0 %v845
  %855 = vmatprep.subr.mxu0 0.0
  %856 = vmatpush1.msra.mxu0 %v846
  %857 = vmatprep.subr.mxu0 0.0
  %858 = vmatpush1.msra.mxu0 0.0
  %859 = vmatprep.subr.mxu0 0.0
  %860 = vmatpush1.msra.mxu0 0.0
  %861 = vmatprep.subr.mxu0 0.0
  %862 = vmatpush1.msra.mxu0 0.0
  %863 = vmatprep.subr.mxu0 0.0
  %864 = vmatpush1.msra.mxu0 0.0
  %865 = vmatprep.subr.mxu0 0.0
  %866 = vmatpush1.msra.mxu0 0.0
  %867 = vmatprep.subr.mxu0 0.0
  %868 = vmatpush1.msra.mxu0 0.0
  %869 = vmatprep.subr.mxu0 0.0
  %870 = vmatpush1.msra.mxu0 0.0
  %871 = vmatprep.subr.mxu0 0.0
  %872 = vmatpush1.msra.mxu0 0.0
  %873 = vmatprep.subr.mxu0 0.0
  %874 = vmatpush1.msra.mxu0 0.0
  %875 = vmatprep.subr.mxu0 0.0
  %876 = vmatpush1.msra.mxu0 0.0
  %877 = vmatprep.subr.mxu0 0.0
  %878 = vmatpush1.msra.mxu0 0.0
  %879 = vmatprep.subr.mxu0 0.0
  %880 = vmatpush1.msra.mxu0 0.0
  %881 = vmatprep.subr.mxu0 0.0
  %882 = vmatpush1.msra.mxu0 0.0
  %883 = vmatprep.subr.mxu0 0.0
  %884 = vmatpush1.msra.mxu0 0.0
  %885 = vmatprep.subr.mxu0 0.0
  %886 = vmatpush1.msra.mxu0 0.0
  %887 = vmatprep.subr.mxu0 0.0
  %888 = vmatpush1.msra.mxu0 0.0
  %889 = vmatprep.subr.mxu0 0.0
  %890 = vmatpush1.msra.mxu0 0.0
  %891 = vmatprep.subr.mxu0 0.0
  %892 = vmatpush1.msra.mxu0 0.0
  %893 = vmatprep.subr.mxu0 0.0
  %894 = vmatpush1.msra.mxu0 0.0
  %895 = vmatprep.subr.mxu0 0.0
  %896 = vmatpush1.msra.mxu0 0.0
  %897 = vmatprep.subr.mxu0 0.0
  %898 = vmatpush1.msra.mxu0 0.0
  %899 = vmatprep.subr.mxu0 0.0
  %900 = vmatpush1.msra.mxu0 0.0
  %901 = vmatprep.subr.mxu0 0.0
  %902 = vmatpush1.msra.mxu0 0.0
  %903 = vmatprep.subr.mxu0 0.0
  %904 = vmatpush1.msra.mxu0 0.0
  %905 = vmatprep.subr.mxu0 0.0
  %906 = vmatpush1.msra.mxu0 0.0
  %907 = vmatprep.subr.mxu0 0.0
  %908 = vmatpush1.msra.mxu0 0.0
  %909 = vmatprep.subr.mxu0 0.0
  %910 = vmatpush1.msra.mxu0 0.0
  %911 = vmatprep.subr.mxu0 0.0
  %912 = vmatpush1.msra.mxu0 0.0
  %913 = vmatprep.subr.mxu0 0.0
  %914 = vmatpush1.msra.mxu0 0.0
  %915 = vmatprep.subr.mxu0 0.0
  %916 = vmatpush1.msra.mxu0 0.0
  %917 = vmatprep.mubr.f32.mxu0 0.0
  %918 = vmatmul.mubr.f32.gmra.mrb[0].mxu0 %v848
  %v919 = vpop.f32.mrb[0].mxu0
  %v920 = vadd.f32 0.0, %v919
  %v921 = vpop.f32.mrb[0].mxu0
  %922 = vmatprep.mubr.f32.mxu0 0.0
  %923 = vmatmul.mubr.f32.gmra.mrb[0].mxu0 %v851
  %v924 = vpop.f32.mrb[0].mxu0
  %v925 = vadd.f32 0.0, %v924
  %v926 = vpop.f32.mrb[0].mxu0
  %927 = vdwg.mxu0
  %v928 = vld [vmem:[%s13] sm:$0xff]
  %v929 = vld [vmem:[%s13 + $0x8] sm:$0xff]
  %v930 = vld [vmem:[%s13 + $0x10] sm:$0xff]
  %v931 = vld [vmem:[%s13 + $0x18] sm:$0xff]
  %v932 = vld [vmem:[%s13 + $0x20] sm:$0xff]
  %v933 = vld [vmem:[%s13 + $0x28] sm:$0xff]
  %v934 = vld [vmem:[%s13 + $0x30] sm:$0xff]
  %v935 = vld [vmem:[%s13 + $0x38] sm:$0xff]
  %v936 = vld [vmem:[%s13 + $0x40] sm:$0xff]
  %v937 = vld [vmem:[%s13 + $0x48] sm:$0xff]
  %v938 = vld [vmem:[%s13 + $0x50] sm:$0xff]
  %v939 = vld [vmem:[%s13 + $0x58] sm:$0xff]
  %v940 = vld [vmem:[%s13 + $0x60] sm:$0xff]
  %v941 = vld [vmem:[%s13 + $0x68] sm:$0xff]
  %v942 = vld [vmem:[%s13 + $0x70] sm:$0xff]
  %v943 = vld [vmem:[%s13 + $0x78] sm:$0xff]
  %944 = vmatprep.subr.mxu0 0.0
  %945 = vmatpush1.msra.mxu0 %v928
  %946 = vmatprep.subr.mxu0 0.0
  %947 = vmatpush1.msra.mxu0 %v929
  %948 = vmatprep.subr.mxu0 0.0
  %949 = vmatpush1.msra.mxu0 %v930
  %950 = vmatprep.subr.mxu0 0.0
  %951 = vmatpush1.msra.mxu0 %v931
  %952 = vmatprep.subr.mxu0 0.0
  %953 = vmatpush1.msra.mxu0 %v932
  %954 = vmatprep.subr.mxu0 0.0
  %955 = vmatpush1.msra.mxu0 %v933
  %956 = vmatprep.subr.mxu0 0.0
  %957 = vmatpush1.msra.mxu0 %v934
  %958 = vmatprep.subr.mxu0 0.0
  %959 = vmatpush1.msra.mxu0 %v935
  %960 = vmatprep.subr.mxu0 0.0
  %961 = vmatpush1.msra.mxu0 %v936
  %962 = vmatprep.subr.mxu0 0.0
  %963 = vmatpush1.msra.mxu0 %v937
  %964 = vmatprep.subr.mxu0 0.0
  %965 = vmatpush1.msra.mxu0 %v938
  %966 = vmatprep.subr.mxu0 0.0
  %967 = vmatpush1.msra.mxu0 %v939
  %968 = vmatprep.subr.mxu0 0.0
  %969 = vmatpush1.msra.mxu0 %v940
  %970 = vmatprep.subr.mxu0 0.0
  %971 = vmatpush1.msra.mxu0 %v941
  %972 = vmatprep.subr.mxu0 0.0
  %973 = vmatpush1.msra.mxu0 %v942
  %974 = vmatprep.subr.mxu0 0.0
  %975 = vmatpush1.msra.mxu0 %v943
  %976 = vmatprep.subr.mxu0 0.0
  %977 = vmatpush1.msra.mxu0 0.0
  %978 = vmatprep.subr.mxu0 0.0
  %979 = vmatpush1.msra.mxu0 0.0
  %980 = vmatprep.subr.mxu0 0.0
  %981 = vmatpush1.msra.mxu0 0.0
  %982 = vmatprep.subr.mxu0 0.0
  %983 = vmatpush1.msra.mxu0 0.0
  %984 = vmatprep.subr.mxu0 0.0
  %985 = vmatpush1.msra.mxu0 0.0
  %986 = vmatprep.subr.mxu0 0.0
  %987 = vmatpush1.msra.mxu0 0.0
  %988 = vmatprep.subr.mxu0 0.0
  %989 = vmatpush1.msra.mxu0 0.0
  %990 = vmatprep.subr.mxu0 0.0
  %991 = vmatpush1.msra.mxu0 0.0
  %992 = vmatprep.subr.mxu0 0.0
  %993 = vmatpush1.msra.mxu0 0.0
  %994 = vmatprep.subr.mxu0 0.0
  %995 = vmatpush1.msra.mxu0 0.0
  %996 = vmatprep.subr.mxu0 0.0
  %997 = vmatpush1.msra.mxu0 0.0
  %998 = vmatprep.subr.mxu0 0.0
  %999 = vmatpush1.msra.mxu0 0.0
  %1000 = vmatprep.subr.mxu0 0.0
  %1001 = vmatpush1.msra.mxu0 0.0
  %1002 = vmatprep.subr.mxu0 0.0
  %1003 = vmatpush1.msra.mxu0 0.0
  %1004 = vmatprep.subr.mxu0 0.0
  %1005 = vmatpush1.msra.mxu0 0.0
  %1006 = vmatprep.subr.mxu0 0.0
  %1007 = vmatpush1.msra.mxu0 0.0
  %1008 = vmatprep.mubr.f32.mxu0 0.0
  %1009 = vmatmul.mubr.f32.gmra.mrb[0].mxu0 %v920
  %v1010 = vpop.f32.mrb[0].mxu0
  %v1011 = vadd.f32 0.0, %v1010
  %v1012 = vpop.f32.mrb[0].mxu0
  %1013 = vmatprep.mubr.f32.mxu0 0.0
  %1014 = vmatmul.mubr.f32.gmra.mrb[0].mxu0 %v925
  %v1015 = vpop.f32.mrb[0].mxu0
  %v1016 = vadd.f32 0.0, %v1015
  %v1017 = vpop.f32.mrb[0].mxu0
  %1018 = vdwg.mxu0
  %v1019 = vld [vmem:[%s14] sm:$0xff]
  %v1020 = vld [vmem:[%s14 + $0x8] sm:$0xff]
  %v1021 = vld [vmem:[%s14 + $0x10] sm:$0xff]
  %v1022 = vld [vmem:[%s14 + $0x18] sm:$0xff]
  %v1023 = vld [vmem:[%s14 + $0x20] sm:$0xff]
  %v1024 = vld [vmem:[%s14 + $0x28] sm:$0xff]
  %v1025 = vld [vmem:[%s14 + $0x30] sm:$0xff]
  %v1026 = vld [vmem:[%s14 + $0x38] sm:$0xff]
  %v1027 = vld [vmem:[%s14 + $0x40] sm:$0xff]
  %v1028 = vld [vmem:[%s14 + $0x48] sm:$0xff]
  %v1029 = vld [vmem:[%s14 + $0x50] sm:$0xff]
  %v1030 = vld [vmem:[%s14 + $0x58] sm:$0xff]
  %v1031 = vld [vmem:[%s14 + $0x60] sm:$0xff]
  %v1032 = vld [vmem:[%s14 + $0x68] sm:$0xff]
  %v1033 = vld [vmem:[%s14 + $0x70] sm:$0xff]
  %v1034 = vld [vmem:[%s14 + $0x78] sm:$0xff]
  %1035 = vmatprep.subr.mxu0 0.0
  %1036 = vmatpush1.msra.mxu0 %v1019
  %1037 = vmatprep.subr.mxu0 0.0
  %1038 = vmatpush1.msra.mxu0 %v1020
  %1039 = vmatprep.subr.mxu0 0.0
  %1040 = vmatpush1.msra.mxu0 %v1021
  %1041 = vmatprep.subr.mxu0 0.0
  %1042 = vmatpush1.msra.mxu0 %v1022
  %1043 = vmatprep.subr.mxu0 0.0
  %1044 = vmatpush1.msra.mxu0 %v1023
  %1045 = vmatprep.subr.mxu0 0.0
  %1046 = vmatpush1.msra.mxu0 %v1024
  %1047 = vmatprep.subr.mxu0 0.0
  %1048 = vmatpush1.msra.mxu0 %v1025
  %1049 = vmatprep.subr.mxu0 0.0
  %1050 = vmatpush1.msra.mxu0 %v1026
  %1051 = vmatprep.subr.mxu0 0.0
  %1052 = vmatpush1.msra.mxu0 %v1027
  %1053 = vmatprep.subr.mxu0 0.0
  %1054 = vmatpush1.msra.mxu0 %v1028
  %1055 = vmatprep.subr.mxu0 0.0
  %1056 = vmatpush1.msra.mxu0 %v1029
  %1057 = vmatprep.subr.mxu0 0.0
  %1058 = vmatpush1.msra.mxu0 %v1030
  %1059 = vmatprep.subr.mxu0 0.0
  %1060 = vmatpush1.msra.mxu0 %v1031
  %1061 = vmatprep.subr.mxu0 0.0
  %1062 = vmatpush1.msra.mxu0 %v1032
  %1063 = vmatprep.subr.mxu0 0.0
  %1064 = vmatpush1.msra.mxu0 %v1033
  %1065 = vmatprep.subr.mxu0 0.0
  %1066 = vmatpush1.msra.mxu0 %v1034
  %1067 = vmatprep.subr.mxu0 0.0
  %1068 = vmatpush1.msra.mxu0 0.0
  %1069 = vmatprep.subr.mxu0 0.0
  %1070 = vmatpush1.msra.mxu0 0.0
  %1071 = vmatprep.subr.mxu0 0.0
  %1072 = vmatpush1.msra.mxu0 0.0
  %1073 = vmatprep.subr.mxu0 0.0
  %1074 = vmatpush1.msra.mxu0 0.0
  %1075 = vmatprep.subr.mxu0 0.0
  %1076 = vmatpush1.msra.mxu0 0.0
  %1077 = vmatprep.subr.mxu0 0.0
  %1078 = vmatpush1.msra.mxu0 0.0
  %1079 = vmatprep.subr.mxu0 0.0
  %1080 = vmatpush1.msra.mxu0 0.0
  %1081 = vmatprep.subr.mxu0 0.0
  %1082 = vmatpush1.msra.mxu0 0.0
  %1083 = vmatprep.subr.mxu0 0.0
  %1084 = vmatpush1.msra.mxu0 0.0
  %1085 = vmatprep.subr.mxu0 0.0
  %1086 = vmatpush1.msra.mxu0 0.0
  %1087 = vmatprep.subr.mxu0 0.0
  %1088 = vmatpush1.msra.mxu0 0.0
  %1089 = vmatprep.subr.mxu0 0.0
  %1090 = vmatpush1.msra.mxu0 0.0
  %1091 = vmatprep.subr.mxu0 0.0
  %1092 = vmatpush1.msra.mxu0 0.0
  %1093 = vmatprep.subr.mxu0 0.0
  %1094 = vmatpush1.msra.mxu0 0.0
  %1095 = vmatprep.subr.mxu0 0.0
  %1096 = vmatpush1.msra.mxu0 0.0
  %1097 = vmatprep.subr.mxu0 0.0
  %1098 = vmatpush1.msra.mxu0 0.0
  %1099 = vmatprep.mubr.f32.mxu0 0.0
  %1100 = vmatmul.mubr.f32.gmra.mrb[0].mxu0 %v920
  %v1101 = vpop.f32.mrb[0].mxu0
  %v1102 = vadd.f32 0.0, %v1101
  %v1103 = vpop.f32.mrb[0].mxu0
  %1104 = vmatprep.mubr.f32.mxu0 0.0
  %1105 = vmatmul.mubr.f32.gmra.mrb[0].mxu0 %v925
  %v1106 = vpop.f32.mrb[0].mxu0
  %v1107 = vadd.f32 0.0, %v1106
  %v1108 = vpop.f32.mrb[0].mxu0
  %1109 = vdwg.mxu0
  %v1110 = vlaneseq
  %v1111 = vshrl.u32 %v1110, 7
  %v1112 = vadd.s32 %v1111, 8
  %v1113 = vlaneseq
  %v1114 = vand.u32 %v1113, 127
  %vm1115 = vcmp.eq.s32.totalorder %v1111, %v1114
  %vm1116 = vcmp.eq.s32.totalorder %v1112, %v1114
  %v1117 = vsel %vm1115, 1, 0
  %v1118 = vsel %vm1116, 1, 0
  %v1119 = vcvt.s32.f32 %v1117
  %v1120 = vcvt.s32.f32 %v1118
  %1122 = vset.pattern.permute.xlu0 0
  %1123 = vperm.xlu0 %1122, %v1102
  %v1124 = vpop.permute.xlu0 %1123
  %1127 = vset.pattern.permute.xlu0 0
  %1128 = vperm.xlu0 %1127, %v1107
  %v1129 = vpop.permute.xlu0 %1128
  %v1131 = vmul.f32 %v1124, %v1119
  %v1132 = vmul.f32 %v1129, %v1120
  %1133 = vmatprep.subr.mxu0 0.0
  %1134 = vmatpush1.msra.mxu0 %v1131
  %1135 = vmatprep.subr.mxu0 0.0
  %1136 = vmatpush1.msra.mxu0 %v1132
  %1137 = vmatprep.subr.mxu0 0.0
  %1138 = vmatpush1.msra.mxu0 0.0
  %1139 = vmatprep.subr.mxu0 0.0
  %1140 = vmatpush1.msra.mxu0 0.0
  %1141 = vmatprep.subr.mxu0 0.0
  %1142 = vmatpush1.msra.mxu0 0.0
  %1143 = vmatprep.subr.mxu0 0.0
  %1144 = vmatpush1.msra.mxu0 0.0
  %1145 = vmatprep.subr.mxu0 0.0
  %1146 = vmatpush1.msra.mxu0 0.0
  %1147 = vmatprep.subr.mxu0 0.0
  %1148 = vmatpush1.msra.mxu0 0.0
  %1149 = vmatprep.subr.mxu0 0.0
  %1150 = vmatpush1.msra.mxu0 0.0
  %1151 = vmatprep.subr.mxu0 0.0
  %1152 = vmatpush1.msra.mxu0 0.0
  %1153 = vmatprep.subr.mxu0 0.0
  %1154 = vmatpush1.msra.mxu0 0.0
  %1155 = vmatprep.subr.mxu0 0.0
  %1156 = vmatpush1.msra.mxu0 0.0
  %1157 = vmatprep.subr.mxu0 0.0
  %1158 = vmatpush1.msra.mxu0 0.0
  %1159 = vmatprep.subr.mxu0 0.0
  %1160 = vmatpush1.msra.mxu0 0.0
  %1161 = vmatprep.subr.mxu0 0.0
  %1162 = vmatpush1.msra.mxu0 0.0
  %1163 = vmatprep.subr.mxu0 0.0
  %1164 = vmatpush1.msra.mxu0 0.0
  %1165 = vmatprep.subr.mxu0 0.0
  %1166 = vmatpush1.msra.mxu0 0.0
  %1167 = vmatprep.subr.mxu0 0.0
  %1168 = vmatpush1.msra.mxu0 0.0
  %1169 = vmatprep.subr.mxu0 0.0
  %1170 = vmatpush1.msra.mxu0 0.0
  %1171 = vmatprep.subr.mxu0 0.0
  %1172 = vmatpush1.msra.mxu0 0.0
  %1173 = vmatprep.subr.mxu0 0.0
  %1174 = vmatpush1.msra.mxu0 0.0
  %1175 = vmatprep.subr.mxu0 0.0
  %1176 = vmatpush1.msra.mxu0 0.0
  %1177 = vmatprep.subr.mxu0 0.0
  %1178 = vmatpush1.msra.mxu0 0.0
  %1179 = vmatprep.subr.mxu0 0.0
  %1180 = vmatpush1.msra.mxu0 0.0
  %1181 = vmatprep.subr.mxu0 0.0
  %1182 = vmatpush1.msra.mxu0 0.0
  %1183 = vmatprep.subr.mxu0 0.0
  %1184 = vmatpush1.msra.mxu0 0.0
  %1185 = vmatprep.subr.mxu0 0.0
  %1186 = vmatpush1.msra.mxu0 0.0
  %1187 = vmatprep.subr.mxu0 0.0
  %1188 = vmatpush1.msra.mxu0 0.0
  %1189 = vmatprep.subr.mxu0 0.0
  %1190 = vmatpush1.msra.mxu0 0.0
  %1191 = vmatprep.subr.mxu0 0.0
  %1192 = vmatpush1.msra.mxu0 0.0
  %1193 = vmatprep.subr.mxu0 0.0
  %1194 = vmatpush1.msra.mxu0 0.0
  %1195 = vmatprep.subr.mxu0 0.0
  %1196 = vmatpush1.msra.mxu0 0.0
  %1197 = vmatprep.mubr.f32.mxu0 0.0
  %1198 = vmatmul.mubr.f32.gmra.mrb[0].mxu0 %v232
  %v1199 = vpop.f32.mrb[0].mxu0
  %v1200 = vadd.f32 0.0, %v1199
  %v1201 = vpop.f32.mrb[0].mxu0
  %1202 = vdwg.mxu0
  %1204 = vset.pattern.permute.xlu0 0
  %1205 = vperm.xlu0 %1204, %v1011
  %v1206 = vpop.permute.xlu0 %1205
  %1209 = vset.pattern.permute.xlu0 0
  %1210 = vperm.xlu0 %1209, %v1016
  %v1211 = vpop.permute.xlu0 %1210
  %v1213 = vlaneseq
  %v1214 = vshrl.u32 %v1213, 7
  %v1215 = vsub.s32 0, %v1214
  %v1216 = vrot.slane %v1200, %v1215
  %v1217 = vadd.f32 %v1206, %v1216
  %v1218 = vadd.f32 %v1211, %v1216
  %vm1219 = vcmp.ge.f32.partialorder %v1217, 0.0
  %vm1220 = vcmp.ge.f32.partialorder %v1218, 0.0
  %v1221 = vmul.f32 %v1217, 0.2
  %v1222 = vmul.f32 %v1218, 0.2
  %v1223 = vsel %vm1219, %v1217, %v1221
  %v1224 = vsel %vm1220, %v1218, %v1222
  %v1225 = vld [vmem:[%s11] sm:$0xff]
  %v1226 = vld [vmem:[%s11 + $0x8] sm:$0xff]
  %v1227 = vadd.f32 %v1223, %v1225
  %v1228 = vadd.f32 %v1224, %v1226
  %v1229 = vsel %vm145, %v1227, -inf
  %1230 = vmax.xlane.f32.xlu0 %v1229
  %v1231 = vpop.xlane.xlu0 %1230
  %v1232 = vsel %vm145, %v1228, -inf
  %1233 = vmax.xlane.f32.xlu0 %v1232
  %v1234 = vpop.xlane.xlu0 %1233
  %v1235 = vsub.f32 %v1227, %v1231
  %v1236 = vsub.f32 %v1228, %v1234
  %v1237 = vmul.f32 %v1235, 1.442695
  %v1238 = vpow.pop %v1237
  %v1239 = vmul.f32 %v1236, 1.442695
  %v1240 = vpow.pop %v1239
  %v1241 = vsel %vm145, %v1238, 0.0
  %1242 = vadd.xlane.f32.xlu0 %v1241
  %v1243 = vpop.xlane.xlu0 %1242
  %v1244 = vsel %vm145, %v1240, 0.0
  %1245 = vadd.xlane.f32.xlu0 %v1244
  %v1246 = vpop.xlane.xlu0 %1245
  %v1247 = vmax.f32 %v1243, 1e-30
  %v1248 = vmax.f32 %v1246, 1e-30
  %v1249 = vrcp.pop %v1247
  %v1250 = vrcp.pop %v1248
  %v1251 = vmul.f32 %v1238, %v1249
  %v1252 = vmul.f32 %v1240, %v1250
  %v1253 = vld [vmem:[%s15] sm:$0x1]
  %v1255 = vlaneseq
  %v1256 = vshrl.u32 %v1255, 7
  %v1257 = vsub.s32 0, %v1256
  %v1258 = vrot.slane %v1253, %v1257
  %v1261 = vsel %vm145, %v1251, 0
  %v1264 = vsel %vm145, %v1252, 0
  %1266 = vmatprep.subr.mxu0 0.0
  %1267 = vmatpush1.msra.mxu0 %v920
  %1268 = vmatprep.subr.mxu0 0.0
  %1269 = vmatpush1.msra.mxu0 %v925
  %1270 = vmatprep.subr.mxu0 0.0
  %1271 = vmatpush1.msra.mxu0 0.0
  %1272 = vmatprep.subr.mxu0 0.0
  %1273 = vmatpush1.msra.mxu0 0.0
  %1274 = vmatprep.subr.mxu0 0.0
  %1275 = vmatpush1.msra.mxu0 0.0
  %1276 = vmatprep.subr.mxu0 0.0
  %1277 = vmatpush1.msra.mxu0 0.0
  %1278 = vmatprep.subr.mxu0 0.0
  %1279 = vmatpush1.msra.mxu0 0.0
  %1280 = vmatprep.subr.mxu0 0.0
  %1281 = vmatpush1.msra.mxu0 0.0
  %1282 = vmatprep.subr.mxu0 0.0
  %1283 = vmatpush1.msra.mxu0 0.0
  %1284 = vmatprep.subr.mxu0 0.0
  %1285 = vmatpush1.msra.mxu0 0.0
  %1286 = vmatprep.subr.mxu0 0.0
  %1287 = vmatpush1.msra.mxu0 0.0
  %1288 = vmatprep.subr.mxu0 0.0
  %1289 = vmatpush1.msra.mxu0 0.0
  %1290 = vmatprep.subr.mxu0 0.0
  %1291 = vmatpush1.msra.mxu0 0.0
  %1292 = vmatprep.subr.mxu0 0.0
  %1293 = vmatpush1.msra.mxu0 0.0
  %1294 = vmatprep.subr.mxu0 0.0
  %1295 = vmatpush1.msra.mxu0 0.0
  %1296 = vmatprep.subr.mxu0 0.0
  %1297 = vmatpush1.msra.mxu0 0.0
  %1298 = vmatprep.subr.mxu0 0.0
  %1299 = vmatpush1.msra.mxu0 0.0
  %1300 = vmatprep.subr.mxu0 0.0
  %1301 = vmatpush1.msra.mxu0 0.0
  %1302 = vmatprep.subr.mxu0 0.0
  %1303 = vmatpush1.msra.mxu0 0.0
  %1304 = vmatprep.subr.mxu0 0.0
  %1305 = vmatpush1.msra.mxu0 0.0
  %1306 = vmatprep.subr.mxu0 0.0
  %1307 = vmatpush1.msra.mxu0 0.0
  %1308 = vmatprep.subr.mxu0 0.0
  %1309 = vmatpush1.msra.mxu0 0.0
  %1310 = vmatprep.subr.mxu0 0.0
  %1311 = vmatpush1.msra.mxu0 0.0
  %1312 = vmatprep.subr.mxu0 0.0
  %1313 = vmatpush1.msra.mxu0 0.0
  %1314 = vmatprep.subr.mxu0 0.0
  %1315 = vmatpush1.msra.mxu0 0.0
  %1316 = vmatprep.subr.mxu0 0.0
  %1317 = vmatpush1.msra.mxu0 0.0
  %1318 = vmatprep.subr.mxu0 0.0
  %1319 = vmatpush1.msra.mxu0 0.0
  %1320 = vmatprep.subr.mxu0 0.0
  %1321 = vmatpush1.msra.mxu0 0.0
  %1322 = vmatprep.subr.mxu0 0.0
  %1323 = vmatpush1.msra.mxu0 0.0
  %1324 = vmatprep.subr.mxu0 0.0
  %1325 = vmatpush1.msra.mxu0 0.0
  %1326 = vmatprep.subr.mxu0 0.0
  %1327 = vmatpush1.msra.mxu0 0.0
  %1328 = vmatprep.subr.mxu0 0.0
  %1329 = vmatpush1.msra.mxu0 0.0
  %1330 = vmatprep.mubr.f32.mxu0 0.0
  %1331 = vmatmul.mubr.f32.gmra.mrb[0].mxu0 %v1261
  %v1332 = vpop.f32.mrb[0].mxu0
  %v1333 = vadd.f32 %v1258, %v1332
  %v1334 = vpop.f32.mrb[0].mxu0
  %1335 = vmatprep.mubr.f32.mxu0 0.0
  %1336 = vmatmul.mubr.f32.gmra.mrb[0].mxu0 %v1264
  %v1337 = vpop.f32.mrb[0].mxu0
  %v1338 = vadd.f32 %v1258, %v1337
  %v1339 = vpop.f32.mrb[0].mxu0
  %1340 = vdwg.mxu0
  %v1341 = vld [vmem:[%s16] sm:$0x1]
  %v1343 = vlaneseq
  %v1344 = vshrl.u32 %v1343, 7
  %v1345 = vsub.s32 0, %v1344
  %v1346 = vrot.slane %v1341, %v1345
  %v1348 = vadd.f32 %v1333, %v1346
  %v1349 = vadd.f32 %v1338, %v1346
  %1350 = vmax.xlane.f32.xlu0 %v1348
  %v1351 = vpop.xlane.xlu0 %1350
  %1352 = vmax.xlane.f32.xlu0 %v1349
  %v1353 = vpop.xlane.xlu0 %1352
  %v1354 = vsub.f32 %v1348, %v1351
  %v1355 = vsub.f32 %v1349, %v1353
  %v1356 = vmul.f32 %v1354, 1.442695
  %v1357 = vpow.pop %v1356
  %v1358 = vmul.f32 %v1355, 1.442695
  %v1359 = vpow.pop %v1358
  %1360 = vadd.xlane.f32.xlu0 %v1357
  %v1361 = vpop.xlane.xlu0 %1360
  %1362 = vadd.xlane.f32.xlu0 %v1359
  %v1363 = vpop.xlane.xlu0 %1362
  %v1364 = vlog2.pop %v1361
  %v1365 = vmul.f32 %v1364, 0.6931472
  %v1366 = vlog2.pop %v1363
  %v1367 = vmul.f32 %v1366, 0.6931472
  %v1368 = vadd.f32 %v1351, %v1365
  %v1369 = vadd.f32 %v1353, %v1367
  %v1370 = vsub.f32 %v1348, %v1368
  %v1371 = vsub.f32 %v1349, %v1369
  %1372 = vst [vmem:[%s17] sm:$0xff] %v1370
  %1373 = vst [vmem:[%s17 + $0x8] sm:$0xff] %v1371
  // Predicated region
  $region70: #{gat_net_forward.1} parent=0 // pred_check
    _
  $region71: #{gat_net_forward.1} parent=0 // pred_check_branch
    %1375 = sbr.rel (0) target = $region73
  $region72: #{gat_net_forward.1} parent=0 // pred_region
    _
  $region73: #{gat_net_forward.1} parent=0 // pred_fallthru
    _
  // Predicated region
  $region74: #{gat_net_forward.1} parent=0 // pred_check
    _
  $region75: #{gat_net_forward.1} parent=0 // pred_check_branch
    %1377 = sbr.rel (0) target = $region77
  $region76: #{gat_net_forward.1} parent=0 // pred_region
    _
  $region77: #{gat_net_forward.1} parent=0 // pred_fallthru
    _

</llo_original>
